<compile_context>
chip_gen: v7x
topology: tpu7x:2x2x1
jax: 0.10.0
libtpu: 0.0.40
codegen_flags: <defaults>
</compile_context>

<pallas_src>
import jax
import jax.numpy as jnp
from jax import lax
from jax.experimental import pallas as pl
from jax.experimental.pallas import tpu as pltpu


_SQRT_HALF = 0.7071067811865476  # 1/sqrt(2), for exact (erf-based) GELU


def _ffn_kernel(x_ref, w1_ref, b1_ref, w2_ref, b2_ref, o_ref, acc_ref):
    j = pl.program_id(1)  # ffn-chunk index (reduction axis)

    @pl.when(j == 0)
    def _init():
        acc_ref[...] = jnp.zeros_like(acc_ref)

    # Cast operands to bf16 once per tile; MXU accumulates in f32.
    x_bf = x_ref[...].astype(jnp.bfloat16)
    w1_bf = w1_ref[...].astype(jnp.bfloat16)
    h = jnp.dot(x_bf, w1_bf, preferred_element_type=jnp.float32)
    h = h + b1_ref[...].astype(jnp.float32)

    # Exact erf-based GELU in f32 (matches torch.nn.GELU() default semantics).
    g = 0.5 * h * (1.0 + lax.erf(h * jnp.float32(_SQRT_HALF)))
    # Dropout(p=0.0) is the identity — nothing to do.

    acc_ref[...] += jnp.dot(
        g.astype(jnp.bfloat16), w2_ref[...].astype(jnp.bfloat16),
        preferred_element_type=jnp.float32)

    @pl.when(j == pl.num_programs(1) - 1)
    def _finalize():
        o_ref[...] = (acc_ref[...] + b2_ref[...].astype(jnp.float32)).astype(o_ref.dtype)


def _round_up(x, m):
    return ((x + m - 1) // m) * m


def _choose_tm(rows, desired=256):
    """Row tile: large (amortizes ~0.35us/step overhead) but keep >= 2 grid steps."""
    if rows <= 8:
        return 8
    tm = min(desired, _round_up(rows, 8))
    if _round_up(rows, tm) // tm < 2:  # ensure the parallel axis has >= 2 steps (v7x 2 TCs)
        tm = max(8, min(tm, _round_up(pl.cdiv(rows, 2), 8)))
    return tm


def _choose_tf(D, F, w_bytes, budget=8 * 1024 * 1024):
    """Largest ffn chunk (multiple of 128, divides F) whose W1+W2 slice fits the budget."""
    if 2 * D * F * w_bytes <= budget or F <= 128 or F % 128 != 0:
        return F
    best = None
    for tf in range(128, F, 128):
        if F % tf == 0 and 2 * D * tf * w_bytes <= budget:
            best = tf
    return best if best is not None else 128


def positionalwise_ffn(x, w1, b1, w2, b2, *, tm=None, tf=None):
    """x: (batch, seq, model_dim). w1: (model_dim, ffn_dim). w2: (ffn_dim, model_dim).
    Biases may be (F,)/(D,) or (1,F)/(1,D)."""
    B, S, D = x.shape
    F = w1.shape[1]
    assert w1.shape == (D, F) and w2.shape == (F, D)
    b1 = jnp.asarray(b1).reshape(1, F)
    b2 = jnp.asarray(b2).reshape(1, D)

    rows = B * S
    x2d = x.reshape(rows, D)

    if tm is None:
        tm = _choose_tm(rows)
    rows_p = _round_up(rows, tm)
    if rows_p != rows:
        x2d = jnp.pad(x2d, ((0, rows_p - rows), (0, 0)))  # zero-padded tail, sliced off below

    x_bytes = jnp.dtype(x.dtype).itemsize
    w_bytes = jnp.dtype(w1.dtype).itemsize
    if tf is None:
        tf = _choose_tf(D, F, w_bytes)
    assert F % tf == 0
    n_f = F // tf
    grid = (rows_p // tm, n_f)

    # VMEM budget: streamed x/out tiles (double-buffered), weight chunks
    # (single-buffered when invariant), f32 accumulator and the (tm, tf) intermediates.
    w_bufs = 1 if n_f == 1 else 2
    est = (2 * tm * D * x_bytes
           + 2 * tm * D * x_bytes
           + w_bufs * 2 * D * tf * w_bytes
           + w_bufs * (tf + D) * 4
           + tm * D * 4
           + 2 * tm * tf * 4)
    vmem_limit = max(32 * 1024 * 1024, min(int(est * 1.5), 128 * 1024 * 1024))

    cost = pl.CostEstimate(
        flops=int(4 * rows_p * D * F),        # two matmuls, 2 flops per MAC each
        transcendentals=int(rows_p * F),      # erf per hidden element
        bytes_accessed=int(rows_p * D * x_bytes * 2
                           + (w1.size + w2.size) * w_bytes
                           + (b1.size + b2.size) * 4),
    )

    def build_in_specs(single_buffer):
        def wspec(shape, idx, invariant):
            if single_buffer and invariant:
                return pl.BlockSpec(shape, idx, pipeline_mode=pl.Buffered(1))
            return pl.BlockSpec(shape, idx)
        return [
            pl.BlockSpec((tm, D), lambda i, j: (i, 0)),                 # x rows (streamed)
            wspec((D, tf), lambda i, j: (0, j), invariant=(n_f == 1)),  # W1 chunk
            wspec((1, tf), lambda i, j: (0, j), invariant=(n_f == 1)),  # b1 chunk
            wspec((tf, D), lambda i, j: (j, 0), invariant=(n_f == 1)),  # W2 chunk
            wspec((1, D), lambda i, j: (0, 0), invariant=True),         # b2
        ]

    def run(single_buffer):
        grid_spec = pltpu.PrefetchScalarGridSpec(
            num_scalar_prefetch=0,
            grid=grid,
            in_specs=build_in_specs(single_buffer),
            out_specs=pl.BlockSpec((tm, D), lambda i, j: (i, 0)),
            scratch_shapes=[pltpu.VMEM((tm, D), jnp.float32)],
        )
        return pl.pallas_call(
            _ffn_kernel,
            out_shape=jax.ShapeDtypeStruct((rows_p, D), x.dtype),
            grid_spec=grid_spec,
            compiler_params=pltpu.CompilerParams(
                dimension_semantics=("parallel", "arbitrary"),
                vmem_limit_bytes=vmem_limit,
            ),
            cost_estimate=cost,
        )(x2d, w1, b1, w2, b2)

    try:
        out2d = run(single_buffer=True)
    except Exception:
        # pl.Buffered(1) not accepted by this jax build -> default double buffering.
        out2d = run(single_buffer=False)

    return out2d[:rows].reshape(B, S, D)


def _reference_f32(x2d, w1, b1, w2, b2):
    h = x2d @ w1 + b1.reshape(1, -1)
    g = 0.5 * h * (1.0 + lax.erf(h * jnp.float32(_SQRT_HALF)))
    return g @ w2 + b2.reshape(1, -1)


def _reference_mxu_precision(x2d, w1, b1, w2, b2):
    """Same math at the kernel's precision: bf16 matmul operands, f32 accumulation."""
    h = jnp.dot(x2d.astype(jnp.bfloat16), w1.astype(jnp.bfloat16),
                preferred_element_type=jnp.float32) + b1.reshape(1, -1)
    g = 0.5 * h * (1.0 + lax.erf(h * jnp.float32(_SQRT_HALF)))
    return jnp.dot(g.astype(jnp.bfloat16), w2.astype(jnp.bfloat16),
                   preferred_element_type=jnp.float32) + b2.reshape(1, -1)


if __name__ == "__main__":
    model_dim, ffn_dim = 256, 512
    batch, seq = 2, 8

    key = jax.random.PRNGKey(0)
    kx, kw1, kw2, kb2 = jax.random.split(key, 4)

    # Mirrors the module's weight_init(): f1/f2.weight ~ N(0, 0.02), f1.bias = 0;
    # f2.bias keeps PyTorch's default Linear init U(-1/sqrt(ffn_dim), 1/sqrt(ffn_dim)).
    w1 = (0.02 * jax.random.normal(kw1, (model_dim, ffn_dim))).astype(jnp.float32)
    b1 = jnp.zeros((ffn_dim,), dtype=jnp.float32)
    w2 = (0.02 * jax.random.normal(kw2, (ffn_dim, model_dim))).astype(jnp.float32)
    bound = 1.0 / float(jnp.sqrt(jnp.float32(ffn_dim)))
    b2 = jax.random.uniform(kb2, (model_dim,), minval=-bound, maxval=bound).astype(jnp.float32)

    x = jax.random.normal(kx, (batch, seq, model_dim), dtype=jnp.float32)

    out = positionalwise_ffn(x, w1, b1, w2, b2)
    out = jax.block_until_ready(out)
    assert out.shape == (batch, seq, model_dim)

    x2d = x.reshape(batch * seq, model_dim)
    ref_mxu = _reference_mxu_precision(x2d, w1, b1, w2, b2).reshape(batch, seq, model_dim)
    ref_f32 = _reference_f32(x2d, w1, b1, w2, b2).reshape(batch, seq, model_dim)

    assert jnp.allclose(out, ref_mxu, atol=1e-3, rtol=1e-3), "mismatch vs bf16-MXU reference"
    assert jnp.allclose(out, ref_f32, atol=2e-2, rtol=2e-2), "mismatch vs f32 reference"

    print("KERNEL_OK")
</pallas_src>

<mosaic_0001>
module attributes {stable_mosaic.version = 11 : i64} {
  func.func @_ffn_kernel(%arg0: i32, %arg1: i32, %arg2: memref<8x256xf32, #tpu.memory_space<vmem>>, %arg3: memref<256x512xf32, #tpu.memory_space<vmem>>, %arg4: memref<1x512xf32, #tpu.memory_space<vmem>>, %arg5: memref<512x256xf32, #tpu.memory_space<vmem>>, %arg6: memref<1x256xf32, #tpu.memory_space<vmem>>, %arg7: memref<8x256xf32, #tpu.memory_space<vmem>>, %arg8: memref<8x256xf32, #tpu.memory_space<vmem>>) attributes {dimension_semantics = [#tpu.dimension_semantics<parallel>, #tpu.dimension_semantics<arbitrary>], iteration_bounds = array<i64: 2, 1>, scalar_prefetch = 0 : i64, scratch_operands = 1 : i64, tpu.core_type = #tpu.core_type<tc>, window_params = [{transform_indices = @transform_0, window_bounds = array<i64: 8, 256>}, {pipeline_mode = #tpu.pipeline_mode<synchronous>, transform_indices = @transform_1, window_bounds = array<i64: 256, 512>}, {pipeline_mode = #tpu.pipeline_mode<synchronous>, transform_indices = @transform_2, window_bounds = array<i64: 1, 512>}, {pipeline_mode = #tpu.pipeline_mode<synchronous>, transform_indices = @transform_3, window_bounds = array<i64: 512, 256>}, {pipeline_mode = #tpu.pipeline_mode<synchronous>, transform_indices = @transform_4, window_bounds = array<i64: 1, 256>}, {transform_indices = @transform_5, window_bounds = array<i64: 8, 256>}]} {
    %c0_i32 = arith.constant 0 : i32
    %0 = arith.cmpi eq, %arg1, %c0_i32 : i32
    %1 = arith.extui %0 : i1 to i32
    %c0_i32_0 = arith.constant 0 : i32
    %2 = arith.cmpi ne, %1, %c0_i32_0 : i32
    scf.if %2 {
      %cst_18 = arith.constant 0.000000e+00 : f32
      %29 = vector.broadcast %cst_18 : f32 to vector<8x256xf32>
      %c0_19 = arith.constant 0 : index
      %c0_20 = arith.constant 0 : index
      %30 = vector.load %arg8[%c0_19, %c0_20] : memref<8x256xf32, #tpu.memory_space<vmem>>, vector<8x256xf32>
      tpu.vector_store %arg8[%c0_19, %c0_20], %29 {strides = array<i32>} : memref<8x256xf32, #tpu.memory_space<vmem>>, vector<8x256xf32>,
    } else {
    }
    %c0 = arith.constant 0 : index
    %c0_1 = arith.constant 0 : index
    %3 = vector.load %arg2[%c0, %c0_1] : memref<8x256xf32, #tpu.memory_space<vmem>>, vector<8x256xf32>
    %4 = arith.truncf %3 : vector<8x256xf32> to vector<8x256xbf16>
    %c0_2 = arith.constant 0 : index
    %c0_3 = arith.constant 0 : index
    %5 = vector.load %arg3[%c0_2, %c0_3] : memref<256x512xf32, #tpu.memory_space<vmem>>, vector<256x512xf32>
    %6 = arith.truncf %5 : vector<256x512xf32> to vector<256x512xbf16>
    %cst = arith.constant dense<0.000000e+00> : vector<8x512xf32>
    %7 = tpu.matmul %4, %6, %cst {dimension_numbers = #tpu.dot_dimension_numbers<[1], [0], [0], [1], [0, 0, 1, 1], [], []>} : vector<8x256xbf16>, vector<256x512xbf16>, vector<8x512xf32> -> vector<8x512xf32>
    %c0_4 = arith.constant 0 : index
    %c0_5 = arith.constant 0 : index
    %8 = vector.load %arg4[%c0_4, %c0_5] : memref<1x512xf32, #tpu.memory_space<vmem>>, vector<1x512xf32>
    %9 = vector.broadcast %8 : vector<1x512xf32> to vector<8x512xf32>
    %10 = arith.addf %7, %9 : vector<8x512xf32>
    %cst_6 = arith.constant 5.000000e-01 : f32
    %11 = vector.broadcast %cst_6 : f32 to vector<8x512xf32>
    %12 = arith.mulf %11, %10 : vector<8x512xf32>
    %cst_7 = arith.constant 0.707106769 : f32
    %13 = vector.broadcast %cst_7 : f32 to vector<8x512xf32>
    %14 = arith.mulf %10, %13 : vector<8x512xf32>
    %15 = math.erf %14 : vector<8x512xf32>
    %cst_8 = arith.constant 1.000000e+00 : f32
    %16 = vector.broadcast %cst_8 : f32 to vector<8x512xf32>
    %17 = arith.addf %16, %15 : vector<8x512xf32>
    %18 = arith.mulf %12, %17 : vector<8x512xf32>
    %c0_9 = arith.constant 0 : index
    %c0_10 = arith.constant 0 : index
    %19 = vector.load %arg8[%c0_9, %c0_10] : memref<8x256xf32, #tpu.memory_space<vmem>>, vector<8x256xf32>
    %20 = arith.truncf %18 : vector<8x512xf32> to vector<8x512xbf16>
    %c0_11 = arith.constant 0 : index
    %c0_12 = arith.constant 0 : index
    %21 = vector.load %arg5[%c0_11, %c0_12] : memref<512x256xf32, #tpu.memory_space<vmem>>, vector<512x256xf32>
    %22 = arith.truncf %21 : vector<512x256xf32> to vector<512x256xbf16>
    %cst_13 = arith.constant dense<0.000000e+00> : vector<8x256xf32>
    %23 = tpu.matmul %20, %22, %cst_13 {dimension_numbers = #tpu.dot_dimension_numbers<[1], [0], [0], [1], [0, 0, 1, 1], [], []>} : vector<8x512xbf16>, vector<512x256xbf16>, vector<8x256xf32> -> vector<8x256xf32>
    %24 = arith.addf %19, %23 : vector<8x256xf32>
    %c0_14 = arith.constant 0 : index
    %c0_15 = arith.constant 0 : index
    %25 = vector.load %arg8[%c0_14, %c0_15] : memref<8x256xf32, #tpu.memory_space<vmem>>, vector<8x256xf32>
    tpu.vector_store %arg8[%c0_14, %c0_15], %24 {strides = array<i32>} : memref<8x256xf32, #tpu.memory_space<vmem>>, vector<8x256xf32>,
    %c0_i32_16 = arith.constant 0 : i32
    %26 = arith.cmpi eq, %arg1, %c0_i32_16 : i32
    %27 = arith.extui %26 : i1 to i32
    %c0_i32_17 = arith.constant 0 : i32
    %28 = arith.cmpi ne, %27, %c0_i32_17 : i32
    scf.if %28 {
      %c0_18 = arith.constant 0 : index
      %c0_19 = arith.constant 0 : index
      %29 = vector.load %arg8[%c0_18, %c0_19] : memref<8x256xf32, #tpu.memory_space<vmem>>, vector<8x256xf32>
      %c0_20 = arith.constant 0 : index
      %c0_21 = arith.constant 0 : index
      %30 = vector.load %arg6[%c0_20, %c0_21] : memref<1x256xf32, #tpu.memory_space<vmem>>, vector<1x256xf32>
      %31 = vector.broadcast %30 : vector<1x256xf32> to vector<8x256xf32>
      %32 = arith.addf %29, %31 : vector<8x256xf32>
      %c0_22 = arith.constant 0 : index
      %c0_23 = arith.constant 0 : index
      %33 = vector.load %arg7[%c0_22, %c0_23] : memref<8x256xf32, #tpu.memory_space<vmem>>, vector<8x256xf32>
      tpu.vector_store %arg7[%c0_22, %c0_23], %32 {strides = array<i32>} : memref<8x256xf32, #tpu.memory_space<vmem>>, vector<8x256xf32>,
    } else {
    }
    return
  }
  func.func @transform_0(%arg0: i32, %arg1: i32) -> (i32, i32) {
    %c0_i32 = arith.constant 0 : i32
    %c0_i32_0 = arith.constant 0 : i32
    return %arg0, %c0_i32 : i32, i32
  }
  func.func @transform_1(%arg0: i32, %arg1: i32) -> (i32, i32) {
    %c0_i32 = arith.constant 0 : i32
    %c0_i32_0 = arith.constant 0 : i32
    return %c0_i32, %arg1 : i32, i32
  }
  func.func @transform_2(%arg0: i32, %arg1: i32) -> (i32, i32) {
    %c0_i32 = arith.constant 0 : i32
    %c0_i32_0 = arith.constant 0 : i32
    return %c0_i32, %arg1 : i32, i32
  }
  func.func @transform_3(%arg0: i32, %arg1: i32) -> (i32, i32) {
    %c0_i32 = arith.constant 0 : i32
    %c0_i32_0 = arith.constant 0 : i32
    return %arg1, %c0_i32 : i32, i32
  }
  func.func @transform_4(%arg0: i32, %arg1: i32) -> (i32, i32) {
    %c0_i32 = arith.constant 0 : i32
    %c0_i32_0 = arith.constant 0 : i32
    %c0_i32_1 = arith.constant 0 : i32
    return %c0_i32, %c0_i32_0 : i32, i32
  }
  func.func @transform_5(%arg0: i32, %arg1: i32) -> (i32, i32) {
    %c0_i32 = arith.constant 0 : i32
    %c0_i32_0 = arith.constant 0 : i32
    return %arg0, %c0_i32 : i32, i32
  }
}

module attributes {stable_mosaic.version = 11 : i64} {
  func.func @_ffn_kernel(%arg0: i32, %arg1: i32, %arg2: memref<8x256xf32, #tpu.memory_space<vmem>>, %arg3: memref<256x512xf32, #tpu.memory_space<vmem>>, %arg4: memref<1x512xf32, #tpu.memory_space<vmem>>, %arg5: memref<512x256xf32, #tpu.memory_space<vmem>>, %arg6: memref<1x256xf32, #tpu.memory_space<vmem>>, %arg7: memref<8x256xf32, #tpu.memory_space<vmem>>, %arg8: memref<8x256xf32, #tpu.memory_space<vmem>>) attributes {dimension_semantics = [#tpu.dimension_semantics<parallel>, #tpu.dimension_semantics<arbitrary>], iteration_bounds = array<i64: 2, 1>, scalar_prefetch = 0 : i64, scratch_operands = 1 : i64, tpu.core_type = #tpu.core_type<tc>, window_params = [{transform_indices = @transform_0, window_bounds = array<i64: 8, 256>}, {transform_indices = @transform_1, window_bounds = array<i64: 256, 512>}, {transform_indices = @transform_2, window_bounds = array<i64: 1, 512>}, {transform_indices = @transform_3, window_bounds = array<i64: 512, 256>}, {pipeline_mode = #tpu.pipeline_mode<synchronous>, transform_indices = @transform_4, window_bounds = array<i64: 1, 256>}, {transform_indices = @transform_5, window_bounds = array<i64: 8, 256>}]} {
    %c0_i32 = arith.constant 0 : i32
    %0 = arith.cmpi eq, %arg1, %c0_i32 : i32
    %1 = arith.extui %0 : i1 to i32
    %c0_i32_0 = arith.constant 0 : i32
    %2 = arith.cmpi ne, %1, %c0_i32_0 : i32
    scf.if %2 {
      %cst_18 = arith.constant 0.000000e+00 : f32
      %29 = vector.broadcast %cst_18 : f32 to vector<8x256xf32>
      %c0_19 = arith.constant 0 : index
      %c0_20 = arith.constant 0 : index
      %30 = vector.load %arg8[%c0_19, %c0_20] : memref<8x256xf32, #tpu.memory_space<vmem>>, vector<8x256xf32>
      tpu.vector_store %arg8[%c0_19, %c0_20], %29 {strides = array<i32>} : memref<8x256xf32, #tpu.memory_space<vmem>>, vector<8x256xf32>,
    } else {
    }
    %c0 = arith.constant 0 : index
    %c0_1 = arith.constant 0 : index
    %3 = vector.load %arg2[%c0, %c0_1] : memref<8x256xf32, #tpu.memory_space<vmem>>, vector<8x256xf32>
    %4 = arith.truncf %3 : vector<8x256xf32> to vector<8x256xbf16>
    %c0_2 = arith.constant 0 : index
    %c0_3 = arith.constant 0 : index
    %5 = vector.load %arg3[%c0_2, %c0_3] : memref<256x512xf32, #tpu.memory_space<vmem>>, vector<256x512xf32>
    %6 = arith.truncf %5 : vector<256x512xf32> to vector<256x512xbf16>
    %cst = arith.constant dense<0.000000e+00> : vector<8x512xf32>
    %7 = tpu.matmul %4, %6, %cst {dimension_numbers = #tpu.dot_dimension_numbers<[1], [0], [0], [1], [0, 0, 1, 1], [], []>} : vector<8x256xbf16>, vector<256x512xbf16>, vector<8x512xf32> -> vector<8x512xf32>
    %c0_4 = arith.constant 0 : index
    %c0_5 = arith.constant 0 : index
    %8 = vector.load %arg4[%c0_4, %c0_5] : memref<1x512xf32, #tpu.memory_space<vmem>>, vector<1x512xf32>
    %9 = vector.broadcast %8 : vector<1x512xf32> to vector<8x512xf32>
    %10 = arith.addf %7, %9 : vector<8x512xf32>
    %cst_6 = arith.constant 5.000000e-01 : f32
    %11 = vector.broadcast %cst_6 : f32 to vector<8x512xf32>
    %12 = arith.mulf %11, %10 : vector<8x512xf32>
    %cst_7 = arith.constant 0.707106769 : f32
    %13 = vector.broadcast %cst_7 : f32 to vector<8x512xf32>
    %14 = arith.mulf %10, %13 : vector<8x512xf32>
    %15 = math.erf %14 : vector<8x512xf32>
    %cst_8 = arith.constant 1.000000e+00 : f32
    %16 = vector.broadcast %cst_8 : f32 to vector<8x512xf32>
    %17 = arith.addf %16, %15 : vector<8x512xf32>
    %18 = arith.mulf %12, %17 : vector<8x512xf32>
    %c0_9 = arith.constant 0 : index
    %c0_10 = arith.constant 0 : index
    %19 = vector.load %arg8[%c0_9, %c0_10] : memref<8x256xf32, #tpu.memory_space<vmem>>, vector<8x256xf32>
    %20 = arith.truncf %18 : vector<8x512xf32> to vector<8x512xbf16>
    %c0_11 = arith.constant 0 : index
    %c0_12 = arith.constant 0 : index
    %21 = vector.load %arg5[%c0_11, %c0_12] : memref<512x256xf32, #tpu.memory_space<vmem>>, vector<512x256xf32>
    %22 = arith.truncf %21 : vector<512x256xf32> to vector<512x256xbf16>
    %cst_13 = arith.constant dense<0.000000e+00> : vector<8x256xf32>
    %23 = tpu.matmul %20, %22, %cst_13 {dimension_numbers = #tpu.dot_dimension_numbers<[1], [0], [0], [1], [0, 0, 1, 1], [], []>} : vector<8x512xbf16>, vector<512x256xbf16>, vector<8x256xf32> -> vector<8x256xf32>
    %24 = arith.addf %19, %23 : vector<8x256xf32>
    %c0_14 = arith.constant 0 : index
    %c0_15 = arith.constant 0 : index
    %25 = vector.load %arg8[%c0_14, %c0_15] : memref<8x256xf32, #tpu.memory_space<vmem>>, vector<8x256xf32>
    tpu.vector_store %arg8[%c0_14, %c0_15], %24 {strides = array<i32>} : memref<8x256xf32, #tpu.memory_space<vmem>>, vector<8x256xf32>,
    %c0_i32_16 = arith.constant 0 : i32
    %26 = arith.cmpi eq, %arg1, %c0_i32_16 : i32
    %27 = arith.extui %26 : i1 to i32
    %c0_i32_17 = arith.constant 0 : i32
    %28 = arith.cmpi ne, %27, %c0_i32_17 : i32
    scf.if %28 {
      %c0_18 = arith.constant 0 : index
      %c0_19 = arith.constant 0 : index
      %29 = vector.load %arg8[%c0_18, %c0_19] : memref<8x256xf32, #tpu.memory_space<vmem>>, vector<8x256xf32>
      %c0_20 = arith.constant 0 : index
      %c0_21 = arith.constant 0 : index
      %30 = vector.load %arg6[%c0_20, %c0_21] : memref<1x256xf32, #tpu.memory_space<vmem>>, vector<1x256xf32>
      %31 = vector.broadcast %30 : vector<1x256xf32> to vector<8x256xf32>
      %32 = arith.addf %29, %31 : vector<8x256xf32>
      %c0_22 = arith.constant 0 : index
      %c0_23 = arith.constant 0 : index
      %33 = vector.load %arg7[%c0_22, %c0_23] : memref<8x256xf32, #tpu.memory_space<vmem>>, vector<8x256xf32>
      tpu.vector_store %arg7[%c0_22, %c0_23], %32 {strides = array<i32>} : memref<8x256xf32, #tpu.memory_space<vmem>>, vector<8x256xf32>,
    } else {
    }
    return
  }
  func.func @transform_0(%arg0: i32, %arg1: i32) -> (i32, i32) {
    %c0_i32 = arith.constant 0 : i32
    %c0_i32_0 = arith.constant 0 : i32
    return %arg0, %c0_i32 : i32, i32
  }
  func.func @transform_1(%arg0: i32, %arg1: i32) -> (i32, i32) {
    %c0_i32 = arith.constant 0 : i32
    %c0_i32_0 = arith.constant 0 : i32
    return %c0_i32, %arg1 : i32, i32
  }
  func.func @transform_2(%arg0: i32, %arg1: i32) -> (i32, i32) {
    %c0_i32 = arith.constant 0 : i32
    %c0_i32_0 = arith.constant 0 : i32
    return %c0_i32, %arg1 : i32, i32
  }
  func.func @transform_3(%arg0: i32, %arg1: i32) -> (i32, i32) {
    %c0_i32 = arith.constant 0 : i32
    %c0_i32_0 = arith.constant 0 : i32
    return %arg1, %c0_i32 : i32, i32
  }
  func.func @transform_4(%arg0: i32, %arg1: i32) -> (i32, i32) {
    %c0_i32 = arith.constant 0 : i32
    %c0_i32_0 = arith.constant 0 : i32
    %c0_i32_1 = arith.constant 0 : i32
    return %c0_i32, %c0_i32_0 : i32, i32
  }
  func.func @transform_5(%arg0: i32, %arg1: i32) -> (i32, i32) {
    %c0_i32 = arith.constant 0 : i32
    %c0_i32_0 = arith.constant 0 : i32
    return %arg0, %c0_i32 : i32, i32
  }
}

</mosaic_0001>

<llo_original>
// kernel: tpu_custom_call.1
$region0: #{tpu_custom_call.1}
  #allocation0 [shape = 'u32[]', space=smem, size = 0x4, offset = 0x4, fixed_abs, tag = 'smem constant byte address 0x4 - core index']
  #allocation1 [shape = 'u32[144,128]{1,0:T(1,128)}', space=vmem, size = 0x12000, scoped, tag = 'internal scratch']
  #allocation2 [shape = 'f32[8,256]{1,0:T(8,128)}', space=vmem, size = 0x2000, scoped, tag = 'scratch operand']
  %s0 = inlined_call_operand.hbm [shape: f32[16,256], index: 0, kind: input, shape index: {}]
  %s1 = inlined_call_operand.hbm [shape: f32[256,512], index: 1, kind: input, shape index: {}]
  %s2 = inlined_call_operand.vmem [shape: f32[1,512], index: 2, kind: input, shape index: {}]
  %s3 = inlined_call_operand.hbm [shape: f32[512,256], index: 3, kind: input, shape index: {}]
  %s4 = inlined_call_operand.vmem [shape: f32[1,256], index: 4, kind: input, shape index: {}]
  %s5 = inlined_call_operand.hbm [shape: f32[16,256], index: 5, kind: output, shape index: {}]
  %s6 = sld [smem:[#allocation0]]
  $region73: #{tpu_custom_call.1} parent=0
    _
  %s8 = ssub.s32 1, %s6
  %s9 = scalar_select 0, %s8, %s6
  $region1: #{tpu_custom_call.1} parent=0
    #allocation3 [shape = 'u8[16384]{0}', space=vmem, size = 0x4000, scoped, tag = 'input window, operand 0']
    #allocation4 [shape = 's32[2]{0}', space=sflag, size = 0x8, scoped, tag = 'scoped memory for tpu_custom_call.1']
    #allocation5 [shape = 's32[2]{0}', space=sflag, size = 0x8, scoped, tag = 'scoped memory for tpu_custom_call.1']
    #allocation6 [shape = 'u8[524288]{0}', space=vmem, size = 0x80000, scoped, tag = 'input window, operand 1, single buffered']
    #allocation7 [shape = 's32[1]{0}', space=sflag, size = 0x4, scoped, tag = 'scoped memory for tpu_custom_call.1']
    #allocation8 [shape = 'u8[524288]{0}', space=vmem, size = 0x80000, scoped, tag = 'input window, operand 3, single buffered']
    #allocation9 [shape = 'u8[16384]{0}', space=vmem, size = 0x4000, scoped, tag = 'output window, operand 0']
    %10 = vsyncpa [#allocation4], 0
    %s11 = scalar_lea.sflag [#allocation4], 1
    %12 = vsyncpa %s11, 0
    %13 = vsyncpa [#allocation7], 0
    %14 = vsyncpa [#allocation5], 0
    %s15 = scalar_lea.sflag [#allocation5], 1
    %16 = vsyncpa %s15, 0
    loop: start=0, step=1, limit=4
    $region2: #{tpu_custom_call.1} parent=1 // loop_pre_header
      _
    $region3: #{tpu_custom_call.1} parent=1 // loop_header
      %s18 = sphi 0, %s22
      %p19 = scmp.ge.s32.totalorder %s18, 4
      %s25 = sphi 0, %s37
      %s26 = sphi 0, %s33
      %s27 = sphi 0, %s25
      %s28 = sphi 0, %s26
      %s29 = sphi 0, %s27
      %s30 = sphi 0, %s28
      %s40 = sphi 0, %s42
      %s43 = sphi 0, %s40
      %s44 = sphi 0, %s43
      %s60 = sphi 0, %s44
      %s66 = sphi 0, %s68
      %s69 = sphi 0, %s66
      %s70 = sphi 0, %s69
      %s86 = sphi 0, %s70
      %s92 = sphi 0, %s94
      %s95 = sphi 0, %s92
      %s96 = sphi 0, %s95
      %s112 = sphi 0, %s96
      %s118 = sphi 0, %s120
      %s121 = sphi 0, %s118
      %s122 = sphi 0, %s121
      %s138 = sphi 0, %s122
      %s142 = sphi 0, %s142
      %s144 = sphi 0, %s142
      %s145 = sphi 0, %s144
      %s159 = sphi 0, %s145
      %s165 = sphi 0, %s167
      %s168 = sphi 0, %s165
      %s169 = sphi 0, %s168
      %s185 = sphi 0, %s169
    $region4: #{tpu_custom_call.1} parent=1 // loop_header_branch
      %21 = sbr.rel (%p19) target = $region8
    $region5: #{tpu_custom_call.1} parent=1 // loop_body
      %s23 = ssub.s32 %s18, 1
      %s24 = ssub.s32 %s18, 2
      %s31 = sadd.s32 1, %s26
      %p32 = scmp.ge.s32.totalorder %s31, 1
      %s33 = scalar_select %p32, 0, %s31
      %s34 = sadd.s32 1, %s25
      %s35 = scalar_select %p32, %s34, %s25
      %p36 = scmp.ge.s32.totalorder %s35, 2
      %s37 = scalar_select %p36, 0, %s35
      %s38 = ssub.s32 %s25, %s37
      %p39 = scmp.eq.s32.totalorder %s38, 0
      %s41 = sadd.s32 %s40, 1
      %s42 = scalar_select %p39, %s40, %s41
      %p45 = pneg %p39
      %p46 = scmp.eq.s32.totalorder %s18, 1
      %p47 = por %p45, %p46
      %p48 = scmp.ne.s32.totalorder %s40, %s43
      %p49 = scmp.eq.s32.totalorder %s18, 0
      %p50 = por %p48, %p49
      %p51 = scmp.ne.s32.totalorder %s40, %s43
      %p52 = scmp.eq.s32.totalorder %s23, 1
      %p53 = por %p51, %p52
      %p54 = scmp.ne.s32.totalorder %s43, %s44
      %p55 = scmp.eq.s32.totalorder %s23, 0
      %p56 = por %p54, %p55
      %p57 = scmp.ne.s32.totalorder %s43, %s44
      %p58 = scmp.eq.s32.totalorder %s24, 1
      %p59 = por %p57, %p58
      %p61 = scmp.ne.s32.totalorder %s44, %s60
      %p62 = scmp.eq.s32.totalorder %s24, 0
      %p63 = por %p61, %p62
      %s64 = ssub.s32 %s26, %s33
      %p65 = scmp.eq.s32.totalorder %s64, 0
      %s67 = sadd.s32 %s66, 1
      %s68 = scalar_select %p65, %s66, %s67
      %p71 = pneg %p65
      %p72 = scmp.eq.s32.totalorder %s18, 1
      %p73 = por %p71, %p72
      %p74 = scmp.ne.s32.totalorder %s66, %s69
      %p75 = scmp.eq.s32.totalorder %s18, 0
      %p76 = por %p74, %p75
      %p77 = scmp.ne.s32.totalorder %s66, %s69
      %p78 = scmp.eq.s32.totalorder %s23, 1
      %p79 = por %p77, %p78
      %p80 = scmp.ne.s32.totalorder %s69, %s70
      %p81 = scmp.eq.s32.totalorder %s23, 0
      %p82 = por %p80, %p81
      %p83 = scmp.ne.s32.totalorder %s69, %s70
      %p84 = scmp.eq.s32.totalorder %s24, 1
      %p85 = por %p83, %p84
      %p87 = scmp.ne.s32.totalorder %s70, %s86
      %p88 = scmp.eq.s32.totalorder %s24, 0
      %p89 = por %p87, %p88
      %s90 = ssub.s32 %s26, %s33
      %p91 = scmp.eq.s32.totalorder %s90, 0
      %s93 = sadd.s32 %s92, 1
      %s94 = scalar_select %p91, %s92, %s93
      %p97 = pneg %p91
      %p98 = scmp.eq.s32.totalorder %s18, 1
      %p99 = por %p97, %p98
      %p100 = scmp.ne.s32.totalorder %s92, %s95
      %p101 = scmp.eq.s32.totalorder %s18, 0
      %p102 = por %p100, %p101
      %p103 = scmp.ne.s32.totalorder %s92, %s95
      %p104 = scmp.eq.s32.totalorder %s23, 1
      %p105 = por %p103, %p104
      %p106 = scmp.ne.s32.totalorder %s95, %s96
      %p107 = scmp.eq.s32.totalorder %s23, 0
      %p108 = por %p106, %p107
      %p109 = scmp.ne.s32.totalorder %s95, %s96
      %p110 = scmp.eq.s32.totalorder %s24, 1
      %p111 = por %p109, %p110
      %p113 = scmp.ne.s32.totalorder %s96, %s112
      %p114 = scmp.eq.s32.totalorder %s24, 0
      %p115 = por %p113, %p114
      %s116 = ssub.s32 %s26, %s33
      %p117 = scmp.eq.s32.totalorder %s116, 0
      %s119 = sadd.s32 %s118, 1
      %s120 = scalar_select %p117, %s118, %s119
      %p123 = pneg %p117
      %p124 = scmp.eq.s32.totalorder %s18, 1
      %p125 = por %p123, %p124
      %p126 = scmp.ne.s32.totalorder %s118, %s121
      %p127 = scmp.eq.s32.totalorder %s18, 0
      %p128 = por %p126, %p127
      %p129 = scmp.ne.s32.totalorder %s118, %s121
      %p130 = scmp.eq.s32.totalorder %s23, 1
      %p131 = por %p129, %p130
      %p132 = scmp.ne.s32.totalorder %s121, %s122
      %p133 = scmp.eq.s32.totalorder %s23, 0
      %p134 = por %p132, %p133
      %p135 = scmp.ne.s32.totalorder %s121, %s122
      %p136 = scmp.eq.s32.totalorder %s24, 1
      %p137 = por %p135, %p136
      %p139 = scmp.ne.s32.totalorder %s122, %s138
      %p140 = scmp.eq.s32.totalorder %s24, 0
      %p141 = por %p139, %p140
      %s143 = sadd.s32 %s142, 1
      %p146 = scmp.eq.s32.totalorder %s18, 1
      %p147 = scmp.ne.s32.totalorder %s142, %s144
      %p148 = scmp.eq.s32.totalorder %s18, 0
      %p149 = por %p147, %p148
      %p150 = scmp.ne.s32.totalorder %s142, %s144
      %p151 = scmp.eq.s32.totalorder %s23, 1
      %p152 = por %p150, %p151
      %p153 = scmp.ne.s32.totalorder %s144, %s145
      %p154 = scmp.eq.s32.totalorder %s23, 0
      %p155 = por %p153, %p154
      %p156 = scmp.ne.s32.totalorder %s144, %s145
      %p157 = scmp.eq.s32.totalorder %s24, 1
      %p158 = por %p156, %p157
      %p160 = scmp.ne.s32.totalorder %s145, %s159
      %p161 = scmp.eq.s32.totalorder %s24, 0
      %p162 = por %p160, %p161
      %s163 = ssub.s32 %s25, %s37
      %p164 = scmp.eq.s32.totalorder %s163, 0
      %s166 = sadd.s32 %s165, 1
      %s167 = scalar_select %p164, %s165, %s166
      %p170 = pneg %p164
      %p171 = scmp.eq.s32.totalorder %s18, 1
      %p172 = por %p170, %p171
      %p173 = scmp.ne.s32.totalorder %s165, %s168
      %p174 = scmp.eq.s32.totalorder %s18, 0
      %p175 = por %p173, %p174
      %p176 = scmp.ne.s32.totalorder %s165, %s168
      %p177 = scmp.eq.s32.totalorder %s23, 1
      %p178 = por %p176, %p177
      %p179 = scmp.ne.s32.totalorder %s168, %s169
      %p180 = scmp.eq.s32.totalorder %s23, 0
      %p181 = por %p179, %p180
      %p182 = scmp.ne.s32.totalorder %s168, %s169
      %p183 = scmp.eq.s32.totalorder %s24, 1
      %p184 = por %p182, %p183
      %p186 = scmp.ne.s32.totalorder %s169, %s185
      %p187 = scmp.eq.s32.totalorder %s24, 0
      %p188 = por %p186, %p187
      %p189 = scmp.le.s32.totalorder 1, %s18
      %p190 = scmp.lt.s32.totalorder %s18, 3
      %p191 = pnand %p189, %p190
      %p192 = pneg %p191
      // Predicated region
      $region9: #{tpu_custom_call.1} parent=5 // pred_check
        _
      $region10: #{tpu_custom_call.1} parent=5 // pred_check_branch
        %194 = sbr.rel (%p191) target = $region12
      $region11: #{tpu_custom_call.1} parent=5 // pred_region
        %s195 = ssub.s32 %s18, 1
        // Predicated region
        $region13: #{tpu_custom_call.1} parent=11 // pred_check
          %p196 = pneg %p82
        $region14: #{tpu_custom_call.1} parent=11 // pred_check_branch
          %198 = sbr.rel (%p196) target = $region16
        $region15: #{tpu_custom_call.1} parent=11 // pred_region
          %s199 = smul.u32 4, %s28
          %s201 = ssub.s32 16384, 16384
          %202 = vsyncadd [#allocation7], %s201
          %s203 = smul.addr %s199, 128
          %s204 = scalar_lea.hbm %s1, %s203
          %s205 = sshll.u32 [#allocation6], 4
          %s206 = int_to_ptr.vmem [resolvable:$true] %s205
          %211 = dma.hbm_to_vmem [thread:$0]  %s204, 16384, %s206, [#allocation7], 512, 512, 32
        $region16: #{tpu_custom_call.1} parent=11 // pred_fallthru
          _
        // Predicated region
        $region17: #{tpu_custom_call.1} parent=11 // pred_check
          %p212 = pneg %p108
        $region18: #{tpu_custom_call.1} parent=11 // pred_check_branch
          %214 = sbr.rel (%p212) target = $region20
        $region19: #{tpu_custom_call.1} parent=11 // pred_region
          %s215 = smul.u32 4, %s28
          %p216 = scmp.lt.s32.totalorder %s215, 3
          %s217 = scalar_select %p216, %s215, 3
          %s218 = scalar_lea.vmem %s2, %s217
          %s219 = smul.u32 4, %s28
        $region20: #{tpu_custom_call.1} parent=11 // pred_fallthru
          _
        // Predicated region
        $region21: #{tpu_custom_call.1} parent=11 // pred_check
          %p220 = pneg %p134
        $region22: #{tpu_custom_call.1} parent=11 // pred_check_branch
          %222 = sbr.rel (%p220) target = $region24
        $region23: #{tpu_custom_call.1} parent=11 // pred_region
          %s223 = smul.u32 64, %s28
          %s225 = ssub.s32 16384, 16384
          %226 = vsyncadd [#allocation7], %s225
          %s227 = smul.addr %s223, 2
          %s228 = smul.addr %s227, 128
          %s229 = scalar_lea.hbm %s3, %s228
          %s230 = sshll.u32 [#allocation8], 4
          %s231 = int_to_ptr.vmem [resolvable:$true] %s230
          %236 = dma.hbm_to_vmem [thread:$0]  %s229, 16384, %s231, [#allocation7], 256, 256, 16
        $region24: #{tpu_custom_call.1} parent=11 // pred_fallthru
          _
        // Predicated region
        $region25: #{tpu_custom_call.1} parent=11 // pred_check
          %p237 = pneg %p155
        $region26: #{tpu_custom_call.1} parent=11 // pred_check_branch
          %239 = sbr.rel (%p237) target = $region28
        $region27: #{tpu_custom_call.1} parent=11 // pred_region
          _
        $region28: #{tpu_custom_call.1} parent=11 // pred_fallthru
          _
      $region12: #{tpu_custom_call.1} parent=5 // pred_fallthru
        _
      %p240 = scmp.lt.s32.totalorder %s18, 2
      // Predicated region
      $region29: #{tpu_custom_call.1} parent=5 // pred_check
        %p241 = pneg %p240
      $region30: #{tpu_custom_call.1} parent=5 // pred_check_branch
        %243 = sbr.rel (%p241) target = $region32
      $region31: #{tpu_custom_call.1} parent=5 // pred_region
        // Predicated region
        $region33: #{tpu_custom_call.1} parent=31 // pred_check
          %p244 = pneg %p50
        $region34: #{tpu_custom_call.1} parent=31 // pred_check_branch
          %246 = sbr.rel (%p244) target = $region36
        $region35: #{tpu_custom_call.1} parent=31 // pred_region
          %s247 = sand.u32 %s40, 1
          %s248 = scalar_lea.sflag [#allocation4], %s247
          %s249 = sand.u32 %s40, 1
          %s250 = smul.addr %s249, 16
          %s251 = scalar_lea.vmem [#allocation3], %s250
          %s253 = ssub.s32 256, 256
          %254 = vsyncadd %s248, %s253
          %s255 = smul.addr %s25, 2
          %s256 = smul.addr %s255, 128
          %s257 = scalar_lea.hbm %s0, %s256
          %s259 = sshll.u32 %s251, 4
          %s260 = int_to_ptr.vmem [resolvable:$true] %s259
          %262 = dma.hbm_to_vmem [thread:$0]  %s257, 256, %s260, %s248
        $region36: #{tpu_custom_call.1} parent=31 // pred_fallthru
          _
      $region32: #{tpu_custom_call.1} parent=5 // pred_fallthru
        _
      %p263 = scmp.le.s32.totalorder 1, %s18
      %p264 = scmp.lt.s32.totalorder %s18, 3
      %p265 = pnand %p263, %p264
      %p266 = pneg %p265
      // Predicated region
      $region37: #{tpu_custom_call.1} parent=5 // pred_check
        _
      $region38: #{tpu_custom_call.1} parent=5 // pred_check_branch
        %268 = sbr.rel (%p265) target = $region40
      $region39: #{tpu_custom_call.1} parent=5 // pred_region
        %s269 = ssub.s32 %s18, 1
        %s270 = sand.u32 %s43, 1
        %s271 = scalar_lea.sflag [#allocation4], %s270
        %s272 = sand.u32 %s43, 1
        %s273 = smul.addr %s272, 16
        %s274 = scalar_lea.vmem [#allocation3], %s273
        // Predicated region
        $region41: #{tpu_custom_call.1} parent=39 // pred_check
          %p275 = pneg %p56
        $region42: #{tpu_custom_call.1} parent=39 // pred_check_branch
          %277 = sbr.rel (%p275) target = $region44
        $region43: #{tpu_custom_call.1} parent=39 // pred_region
          %278 = dma.done %s271, 256
        $region44: #{tpu_custom_call.1} parent=39 // pred_fallthru
          _
        // Predicated region
        $region45: #{tpu_custom_call.1} parent=39 // pred_check
          %p279 = pneg %p82
        $region46: #{tpu_custom_call.1} parent=39 // pred_check_branch
          %281 = sbr.rel (%p279) target = $region48
        $region47: #{tpu_custom_call.1} parent=39 // pred_region
          %282 = dma.done [#allocation7], 16384
        $region48: #{tpu_custom_call.1} parent=39 // pred_fallthru
          _
        // Predicated region
        $region49: #{tpu_custom_call.1} parent=39 // pred_check
          %p283 = pneg %p134
        $region50: #{tpu_custom_call.1} parent=39 // pred_check_branch
          %285 = sbr.rel (%p283) target = $region52
        $region51: #{tpu_custom_call.1} parent=39 // pred_region
          %286 = dma.done [#allocation7], 16384
        $region52: #{tpu_custom_call.1} parent=39 // pred_fallthru
          _
        %s287 = sand.u32 %s43, 1
        %s288 = scalar_lea.sflag [#allocation4], %s287
        %s289 = sand.u32 %s43, 1
        %s290 = smul.addr %s289, 16
        %s291 = scalar_lea.vmem [#allocation3], %s290
        %p292 = pneg %p56
        %p293 = pneg %p53
        %p294 = pneg %p82
        %p295 = pneg %p79
        %s296 = smul.u32 4, %s28
        %p297 = scmp.lt.s32.totalorder %s296, 3
        %s298 = scalar_select %p297, %s296, 3
        %s299 = scalar_lea.vmem %s2, %s298
        %p300 = pneg %p108
        %p301 = pneg %p105
        %p302 = pneg %p134
        %p303 = pneg %p131
        %p304 = pneg %p155
        %p305 = pneg %p152
        %p306 = pneg %p181
        %p307 = pneg %p178
        %s308 = sand.u32 %s168, 1
        %s309 = scalar_lea.sflag [#allocation5], %s308
        %s310 = sand.u32 %s168, 1
        %s311 = smul.addr %s310, 16
        %s312 = scalar_lea.vmem [#allocation9], %s311
        %s313 = smul.u32 4, %s28
        %s314 = smul.u32 4, %s28
        %p315 = scmp.lt.s32.totalorder %s314, 3
        %s316 = scalar_select %p315, %s314, 3
        %s317 = scalar_lea.vmem %s2, %s316
        %s318 = smul.u32 4, %s28
        %s319 = smul.u32 64, %s28
        %p320 = scmp.eq.s32.totalorder %s28, 0
        // Predicated region
        $region53: #{tpu_custom_call.1} parent=39 // pred_check
          %p321 = pneg %p320
        $region54: #{tpu_custom_call.1} parent=39 // pred_check_branch
          %323 = sbr.rel (%p321) target = $region56
        $region55: #{tpu_custom_call.1} parent=39 // pred_region
          %324 = vst [vmem:[#allocation2] sm:$0xff] 0.0
          %325 = vst [vmem:[#allocation2 + $0x8] sm:$0xff] 0.0
        $region56: #{tpu_custom_call.1} parent=39 // pred_fallthru
          _
        %v326 = vld [vmem:[%s274] sm:$0xff]
        %v327 = vld [vmem:[%s274 + $0x8] sm:$0xff]
        %v328 = vpack.c.bf16 %v326, %v326
        %v329 = vpack.c.bf16 %v327, %v327
        %v330 = vld [vmem:[#allocation6] sm:$0xff]
        %v331 = vld [vmem:[#allocation6 + $0x8] sm:$0xff]
        %v332 = vld [vmem:[#allocation6 + $0x10] sm:$0xff]
        %v333 = vld [vmem:[#allocation6 + $0x18] sm:$0xff]
        %v334 = vld [vmem:[#allocation6 + $0x20] sm:$0xff]
        %v335 = vld [vmem:[#allocation6 + $0x28] sm:$0xff]
        %v336 = vld [vmem:[#allocation6 + $0x30] sm:$0xff]
        %v337 = vld [vmem:[#allocation6 + $0x38] sm:$0xff]
        %v338 = vld [vmem:[#allocation6 + $0x40] sm:$0xff]
        %v339 = vld [vmem:[#allocation6 + $0x48] sm:$0xff]
        %v340 = vld [vmem:[#allocation6 + $0x50] sm:$0xff]
        %v341 = vld [vmem:[#allocation6 + $0x58] sm:$0xff]
        %v342 = vld [vmem:[#allocation6 + $0x60] sm:$0xff]
        %v343 = vld [vmem:[#allocation6 + $0x68] sm:$0xff]
        %v344 = vld [vmem:[#allocation6 + $0x70] sm:$0xff]
        %v345 = vld [vmem:[#allocation6 + $0x78] sm:$0xff]
        %v346 = vld [vmem:[#allocation6 + $0x80] sm:$0xff]
        %v347 = vld [vmem:[#allocation6 + $0x88] sm:$0xff]
        %v348 = vld [vmem:[#allocation6 + $0x90] sm:$0xff]
        %v349 = vld [vmem:[#allocation6 + $0x98] sm:$0xff]
        %v350 = vld [vmem:[#allocation6 + $0xa0] sm:$0xff]
        %v351 = vld [vmem:[#allocation6 + $0xa8] sm:$0xff]
        %v352 = vld [vmem:[#allocation6 + $0xb0] sm:$0xff]
        %v353 = vld [vmem:[#allocation6 + $0xb8] sm:$0xff]
        %v354 = vld [vmem:[#allocation6 + $0xc0] sm:$0xff]
        %v355 = vld [vmem:[#allocation6 + $0xc8] sm:$0xff]
        %v356 = vld [vmem:[#allocation6 + $0xd0] sm:$0xff]
        %v357 = vld [vmem:[#allocation6 + $0xd8] sm:$0xff]
        %v358 = vld [vmem:[#allocation6 + $0xe0] sm:$0xff]
        %v359 = vld [vmem:[#allocation6 + $0xe8] sm:$0xff]
        %v360 = vld [vmem:[#allocation6 + $0xf0] sm:$0xff]
        %v361 = vld [vmem:[#allocation6 + $0xf8] sm:$0xff]
        %v362 = vld [vmem:[#allocation6 + $0x100] sm:$0xff]
        %v363 = vld [vmem:[#allocation6 + $0x108] sm:$0xff]
        %v364 = vld [vmem:[#allocation6 + $0x110] sm:$0xff]
        %v365 = vld [vmem:[#allocation6 + $0x118] sm:$0xff]
        %v366 = vld [vmem:[#allocation6 + $0x120] sm:$0xff]
        %v367 = vld [vmem:[#allocation6 + $0x128] sm:$0xff]
        %v368 = vld [vmem:[#allocation6 + $0x130] sm:$0xff]
        %v369 = vld [vmem:[#allocation6 + $0x138] sm:$0xff]
        %v370 = vld [vmem:[#allocation6 + $0x140] sm:$0xff]
        %v371 = vld [vmem:[#allocation6 + $0x148] sm:$0xff]
        %v372 = vld [vmem:[#allocation6 + $0x150] sm:$0xff]
        %v373 = vld [vmem:[#allocation6 + $0x158] sm:$0xff]
        %v374 = vld [vmem:[#allocation6 + $0x160] sm:$0xff]
        %v375 = vld [vmem:[#allocation6 + $0x168] sm:$0xff]
        %v376 = vld [vmem:[#allocation6 + $0x170] sm:$0xff]
        %v377 = vld [vmem:[#allocation6 + $0x178] sm:$0xff]
        %v378 = vld [vmem:[#allocation6 + $0x180] sm:$0xff]
        %v379 = vld [vmem:[#allocation6 + $0x188] sm:$0xff]
        %v380 = vld [vmem:[#allocation6 + $0x190] sm:$0xff]
        %v381 = vld [vmem:[#allocation6 + $0x198] sm:$0xff]
        %v382 = vld [vmem:[#allocation6 + $0x1a0] sm:$0xff]
        %v383 = vld [vmem:[#allocation6 + $0x1a8] sm:$0xff]
        %v384 = vld [vmem:[#allocation6 + $0x1b0] sm:$0xff]
        %v385 = vld [vmem:[#allocation6 + $0x1b8] sm:$0xff]
        %v386 = vld [vmem:[#allocation6 + $0x1c0] sm:$0xff]
        %v387 = vld [vmem:[#allocation6 + $0x1c8] sm:$0xff]
        %v388 = vld [vmem:[#allocation6 + $0x1d0] sm:$0xff]
        %v389 = vld [vmem:[#allocation6 + $0x1d8] sm:$0xff]
        %v390 = vld [vmem:[#allocation6 + $0x1e0] sm:$0xff]
        %v391 = vld [vmem:[#allocation6 + $0x1e8] sm:$0xff]
        %v392 = vld [vmem:[#allocation6 + $0x1f0] sm:$0xff]
        %v393 = vld [vmem:[#allocation6 + $0x1f8] sm:$0xff]
        %v394 = vld [vmem:[#allocation6 + $0x200] sm:$0xff]
        %v395 = vld [vmem:[#allocation6 + $0x208] sm:$0xff]
        %v396 = vld [vmem:[#allocation6 + $0x210] sm:$0xff]
        %v397 = vld [vmem:[#allocation6 + $0x218] sm:$0xff]
        %v398 = vld [vmem:[#allocation6 + $0x220] sm:$0xff]
        %v399 = vld [vmem:[#allocation6 + $0x228] sm:$0xff]
        %v400 = vld [vmem:[#allocation6 + $0x230] sm:$0xff]
        %v401 = vld [vmem:[#allocation6 + $0x238] sm:$0xff]
        %v402 = vld [vmem:[#allocation6 + $0x240] sm:$0xff]
        %v403 = vld [vmem:[#allocation6 + $0x248] sm:$0xff]
        %v404 = vld [vmem:[#allocation6 + $0x250] sm:$0xff]
        %v405 = vld [vmem:[#allocation6 + $0x258] sm:$0xff]
        %v406 = vld [vmem:[#allocation6 + $0x260] sm:$0xff]
        %v407 = vld [vmem:[#allocation6 + $0x268] sm:$0xff]
        %v408 = vld [vmem:[#allocation6 + $0x270] sm:$0xff]
        %v409 = vld [vmem:[#allocation6 + $0x278] sm:$0xff]
        %v410 = vld [vmem:[#allocation6 + $0x280] sm:$0xff]
        %v411 = vld [vmem:[#allocation6 + $0x288] sm:$0xff]
        %v412 = vld [vmem:[#allocation6 + $0x290] sm:$0xff]
        %v413 = vld [vmem:[#allocation6 + $0x298] sm:$0xff]
        %v414 = vld [vmem:[#allocation6 + $0x2a0] sm:$0xff]
        %v415 = vld [vmem:[#allocation6 + $0x2a8] sm:$0xff]
        %v416 = vld [vmem:[#allocation6 + $0x2b0] sm:$0xff]
        %v417 = vld [vmem:[#allocation6 + $0x2b8] sm:$0xff]
        %v418 = vld [vmem:[#allocation6 + $0x2c0] sm:$0xff]
        %v419 = vld [vmem:[#allocation6 + $0x2c8] sm:$0xff]
        %v420 = vld [vmem:[#allocation6 + $0x2d0] sm:$0xff]
        %v421 = vld [vmem:[#allocation6 + $0x2d8] sm:$0xff]
        %v422 = vld [vmem:[#allocation6 + $0x2e0] sm:$0xff]
        %v423 = vld [vmem:[#allocation6 + $0x2e8] sm:$0xff]
        %v424 = vld [vmem:[#allocation6 + $0x2f0] sm:$0xff]
        %v425 = vld [vmem:[#allocation6 + $0x2f8] sm:$0xff]
        %v426 = vld [vmem:[#allocation6 + $0x300] sm:$0xff]
        %v427 = vld [vmem:[#allocation6 + $0x308] sm:$0xff]
        %v428 = vld [vmem:[#allocation6 + $0x310] sm:$0xff]
        %v429 = vld [vmem:[#allocation6 + $0x318] sm:$0xff]
        %v430 = vld [vmem:[#allocation6 + $0x320] sm:$0xff]
        %v431 = vld [vmem:[#allocation6 + $0x328] sm:$0xff]
        %v432 = vld [vmem:[#allocation6 + $0x330] sm:$0xff]
        %v433 = vld [vmem:[#allocation6 + $0x338] sm:$0xff]
        %v434 = vld [vmem:[#allocation6 + $0x340] sm:$0xff]
        %v435 = vld [vmem:[#allocation6 + $0x348] sm:$0xff]
        %v436 = vld [vmem:[#allocation6 + $0x350] sm:$0xff]
        %v437 = vld [vmem:[#allocation6 + $0x358] sm:$0xff]
        %v438 = vld [vmem:[#allocation6 + $0x360] sm:$0xff]
        %v439 = vld [vmem:[#allocation6 + $0x368] sm:$0xff]
        %v440 = vld [vmem:[#allocation6 + $0x370] sm:$0xff]
        %v441 = vld [vmem:[#allocation6 + $0x378] sm:$0xff]
        %v442 = vld [vmem:[#allocation6 + $0x380] sm:$0xff]
        %v443 = vld [vmem:[#allocation6 + $0x388] sm:$0xff]
        %v444 = vld [vmem:[#allocation6 + $0x390] sm:$0xff]
        %v445 = vld [vmem:[#allocation6 + $0x398] sm:$0xff]
        %v446 = vld [vmem:[#allocation6 + $0x3a0] sm:$0xff]
        %v447 = vld [vmem:[#allocation6 + $0x3a8] sm:$0xff]
        %v448 = vld [vmem:[#allocation6 + $0x3b0] sm:$0xff]
        %v449 = vld [vmem:[#allocation6 + $0x3b8] sm:$0xff]
        %v450 = vld [vmem:[#allocation6 + $0x3c0] sm:$0xff]
        %v451 = vld [vmem:[#allocation6 + $0x3c8] sm:$0xff]
        %v452 = vld [vmem:[#allocation6 + $0x3d0] sm:$0xff]
        %v453 = vld [vmem:[#allocation6 + $0x3d8] sm:$0xff]
        %v454 = vld [vmem:[#allocation6 + $0x3e0] sm:$0xff]
        %v455 = vld [vmem:[#allocation6 + $0x3e8] sm:$0xff]
        %v456 = vld [vmem:[#allocation6 + $0x3f0] sm:$0xff]
        %v457 = vld [vmem:[#allocation6 + $0x3f8] sm:$0xff]
        %v458 = vpack.c.bf16 %v334, %v330
        %v459 = vpack.c.bf16 %v335, %v331
        %v460 = vpack.c.bf16 %v336, %v332
        %v461 = vpack.c.bf16 %v337, %v333
        %v462 = vpack.c.bf16 %v342, %v338
        %v463 = vpack.c.bf16 %v343, %v339
        %v464 = vpack.c.bf16 %v344, %v340
        %v465 = vpack.c.bf16 %v345, %v341
        %v466 = vpack.c.bf16 %v350, %v346
        %v467 = vpack.c.bf16 %v351, %v347
        %v468 = vpack.c.bf16 %v352, %v348
        %v469 = vpack.c.bf16 %v353, %v349
        %v470 = vpack.c.bf16 %v358, %v354
        %v471 = vpack.c.bf16 %v359, %v355
        %v472 = vpack.c.bf16 %v360, %v356
        %v473 = vpack.c.bf16 %v361, %v357
        %v474 = vpack.c.bf16 %v366, %v362
        %v475 = vpack.c.bf16 %v367, %v363
        %v476 = vpack.c.bf16 %v368, %v364
        %v477 = vpack.c.bf16 %v369, %v365
        %v478 = vpack.c.bf16 %v374, %v370
        %v479 = vpack.c.bf16 %v375, %v371
        %v480 = vpack.c.bf16 %v376, %v372
        %v481 = vpack.c.bf16 %v377, %v373
        %v482 = vpack.c.bf16 %v382, %v378
        %v483 = vpack.c.bf16 %v383, %v379
        %v484 = vpack.c.bf16 %v384, %v380
        %v485 = vpack.c.bf16 %v385, %v381
        %v486 = vpack.c.bf16 %v390, %v386
        %v487 = vpack.c.bf16 %v391, %v387
        %v488 = vpack.c.bf16 %v392, %v388
        %v489 = vpack.c.bf16 %v393, %v389
        %v490 = vpack.c.bf16 %v398, %v394
        %v491 = vpack.c.bf16 %v399, %v395
        %v492 = vpack.c.bf16 %v400, %v396
        %v493 = vpack.c.bf16 %v401, %v397
        %v494 = vpack.c.bf16 %v406, %v402
        %v495 = vpack.c.bf16 %v407, %v403
        %v496 = vpack.c.bf16 %v408, %v404
        %v497 = vpack.c.bf16 %v409, %v405
        %v498 = vpack.c.bf16 %v414, %v410
        %v499 = vpack.c.bf16 %v415, %v411
        %v500 = vpack.c.bf16 %v416, %v412
        %v501 = vpack.c.bf16 %v417, %v413
        %v502 = vpack.c.bf16 %v422, %v418
        %v503 = vpack.c.bf16 %v423, %v419
        %v504 = vpack.c.bf16 %v424, %v420
        %v505 = vpack.c.bf16 %v425, %v421
        %v506 = vpack.c.bf16 %v430, %v426
        %v507 = vpack.c.bf16 %v431, %v427
        %v508 = vpack.c.bf16 %v432, %v428
        %v509 = vpack.c.bf16 %v433, %v429
        %v510 = vpack.c.bf16 %v438, %v434
        %v511 = vpack.c.bf16 %v439, %v435
        %v512 = vpack.c.bf16 %v440, %v436
        %v513 = vpack.c.bf16 %v441, %v437
        %v514 = vpack.c.bf16 %v446, %v442
        %v515 = vpack.c.bf16 %v447, %v443
        %v516 = vpack.c.bf16 %v448, %v444
        %v517 = vpack.c.bf16 %v449, %v445
        %v518 = vpack.c.bf16 %v454, %v450
        %v519 = vpack.c.bf16 %v455, %v451
        %v520 = vpack.c.bf16 %v456, %v452
        %v521 = vpack.c.bf16 %v457, %v453
        %v522 = vld [vmem:[%s317] sm:$0xf]
        %v524 = vlaneseq
        %v525 = vshrl.u32 %v524, 7
        %v526 = vsub.s32 0, %v525
        %v527 = vrot.slane %v522, %v526
        %v528 = vlaneseq
        %v529 = vshrl.u32 %v528, 7
        %v530 = vsub.s32 1, %v529
        %v531 = vrot.slane %v522, %v530
        %v532 = vlaneseq
        %v533 = vshrl.u32 %v532, 7
        %v534 = vsub.s32 2, %v533
        %v535 = vrot.slane %v522, %v534
        %v536 = vlaneseq
        %v537 = vshrl.u32 %v536, 7
        %v538 = vsub.s32 3, %v537
        %v539 = vrot.slane %v522, %v538
        %544 = vmatprep.subr.bf16.mxu0 %v459
        %545 = vmatpush1.bf16.msra.mxu0 %v458
        %546 = vmatprep.subr.bf16.mxu0 %v463
        %547 = vmatpush1.bf16.msra.mxu0 %v462
        %548 = vmatprep.subr.bf16.mxu0 %v467
        %549 = vmatpush1.bf16.msra.mxu0 %v466
        %550 = vmatprep.subr.bf16.mxu0 %v471
        %551 = vmatpush1.bf16.msra.mxu0 %v470
        %552 = vmatprep.subr.bf16.mxu0 %v475
        %553 = vmatpush1.bf16.msra.mxu0 %v474
        %554 = vmatprep.subr.bf16.mxu0 %v479
        %555 = vmatpush1.bf16.msra.mxu0 %v478
        %556 = vmatprep.subr.bf16.mxu0 %v483
        %557 = vmatpush1.bf16.msra.mxu0 %v482
        %558 = vmatprep.subr.bf16.mxu0 %v487
        %559 = vmatpush1.bf16.msra.mxu0 %v486
        %560 = vmatprep.subr.bf16.mxu0 %v491
        %561 = vmatpush1.bf16.msra.mxu0 %v490
        %562 = vmatprep.subr.bf16.mxu0 %v495
        %563 = vmatpush1.bf16.msra.mxu0 %v494
        %564 = vmatprep.subr.bf16.mxu0 %v499
        %565 = vmatpush1.bf16.msra.mxu0 %v498
        %566 = vmatprep.subr.bf16.mxu0 %v503
        %567 = vmatpush1.bf16.msra.mxu0 %v502
        %568 = vmatprep.subr.bf16.mxu0 %v507
        %569 = vmatpush1.bf16.msra.mxu0 %v506
        %570 = vmatprep.subr.bf16.mxu0 %v511
        %571 = vmatpush1.bf16.msra.mxu0 %v510
        %572 = vmatprep.subr.bf16.mxu0 %v515
        %573 = vmatpush1.bf16.msra.mxu0 %v514
        %574 = vmatprep.subr.bf16.mxu0 %v519
        %575 = vmatpush1.bf16.msra.mxu0 %v518
        %576 = vmatprep.mubr.bf16.mxu0 %v329
        %577 = vmatmul.mubr.bf16.gmra.mrb[0].mxu0 %v328
        %v578 = vpop.f32.mrb[0].mxu0
        %v579 = vadd.f32 %v527, %v578
        %v580 = vpop.f32.mrb[0].mxu0
        %v581 = vadd.f32 %v531, %v580
        %v582 = vpop.f32.mrb[0].mxu0
        %v583 = vpop.f32.mrb[0].mxu0
        %584 = vdwg.mxu0
        %585 = vmatprep.subr.bf16.mxu0 %v461
        %586 = vmatpush1.bf16.msra.mxu0 %v460
        %587 = vmatprep.subr.bf16.mxu0 %v465
        %588 = vmatpush1.bf16.msra.mxu0 %v464
        %589 = vmatprep.subr.bf16.mxu0 %v469
        %590 = vmatpush1.bf16.msra.mxu0 %v468
        %591 = vmatprep.subr.bf16.mxu0 %v473
        %592 = vmatpush1.bf16.msra.mxu0 %v472
        %593 = vmatprep.subr.bf16.mxu0 %v477
        %594 = vmatpush1.bf16.msra.mxu0 %v476
        %595 = vmatprep.subr.bf16.mxu0 %v481
        %596 = vmatpush1.bf16.msra.mxu0 %v480
        %597 = vmatprep.subr.bf16.mxu0 %v485
        %598 = vmatpush1.bf16.msra.mxu0 %v484
        %599 = vmatprep.subr.bf16.mxu0 %v489
        %600 = vmatpush1.bf16.msra.mxu0 %v488
        %601 = vmatprep.subr.bf16.mxu0 %v493
        %602 = vmatpush1.bf16.msra.mxu0 %v492
        %603 = vmatprep.subr.bf16.mxu0 %v497
        %604 = vmatpush1.bf16.msra.mxu0 %v496
        %605 = vmatprep.subr.bf16.mxu0 %v501
        %606 = vmatpush1.bf16.msra.mxu0 %v500
        %607 = vmatprep.subr.bf16.mxu0 %v505
        %608 = vmatpush1.bf16.msra.mxu0 %v504
        %609 = vmatprep.subr.bf16.mxu0 %v509
        %610 = vmatpush1.bf16.msra.mxu0 %v508
        %611 = vmatprep.subr.bf16.mxu0 %v513
        %612 = vmatpush1.bf16.msra.mxu0 %v512
        %613 = vmatprep.subr.bf16.mxu0 %v517
        %614 = vmatpush1.bf16.msra.mxu0 %v516
        %615 = vmatprep.subr.bf16.mxu0 %v521
        %616 = vmatpush1.bf16.msra.mxu0 %v520
        %617 = vmatprep.mubr.bf16.mxu0 %v329
        %618 = vmatmul.mubr.bf16.gmra.mrb[0].mxu0 %v328
        %v619 = vpop.f32.mrb[0].mxu0
        %v620 = vadd.f32 %v535, %v619
        %v621 = vpop.f32.mrb[0].mxu0
        %v622 = vadd.f32 %v539, %v621
        %v623 = vpop.f32.mrb[0].mxu0
        %v624 = vpop.f32.mrb[0].mxu0
        %625 = vdwg.mxu0
        %v626 = vmul.f32 %v579, 0.5
        %v627 = vmul.f32 %v581, 0.5
        %v628 = vmul.f32 %v620, 0.5
        %v629 = vmul.f32 %v622, 0.5
        %v630 = vmul.f32 %v579, 0.70710677
        %v631 = vmul.f32 %v581, 0.70710677
        %v632 = vmul.f32 %v620, 0.70710677
        %v633 = vmul.f32 %v622, 0.70710677
        %v634 = verf.f32.pop %v630
        %v635 = verf.f32.pop %v631
        %v636 = verf.f32.pop %v632
        %v637 = verf.f32.pop %v633
        %v638 = vadd.f32 %v634, 1.0
        %v639 = vadd.f32 %v635, 1.0
        %v640 = vadd.f32 %v636, 1.0
        %v641 = vadd.f32 %v637, 1.0
        %v642 = vmul.f32 %v626, %v638
        %v643 = vmul.f32 %v627, %v639
        %v644 = vmul.f32 %v628, %v640
        %v645 = vmul.f32 %v629, %v641
        %v646 = vld [vmem:[#allocation2] sm:$0xff]
        %v647 = vld [vmem:[#allocation2 + $0x8] sm:$0xff]
        %v648 = vpack.c.bf16 %v642, %v642
        %v649 = vpack.c.bf16 %v643, %v643
        %v650 = vpack.c.bf16 %v644, %v644
        %v651 = vpack.c.bf16 %v645, %v645
        %v652 = vld [vmem:[#allocation8] sm:$0xff]
        %v653 = vld [vmem:[#allocation8 + $0x8] sm:$0xff]
        %v654 = vld [vmem:[#allocation8 + $0x10] sm:$0xff]
        %v655 = vld [vmem:[#allocation8 + $0x18] sm:$0xff]
        %v656 = vld [vmem:[#allocation8 + $0x20] sm:$0xff]
        %v657 = vld [vmem:[#allocation8 + $0x28] sm:$0xff]
        %v658 = vld [vmem:[#allocation8 + $0x30] sm:$0xff]
        %v659 = vld [vmem:[#allocation8 + $0x38] sm:$0xff]
        %v660 = vld [vmem:[#allocation8 + $0x40] sm:$0xff]
        %v661 = vld [vmem:[#allocation8 + $0x48] sm:$0xff]
        %v662 = vld [vmem:[#allocation8 + $0x50] sm:$0xff]
        %v663 = vld [vmem:[#allocation8 + $0x58] sm:$0xff]
        %v664 = vld [vmem:[#allocation8 + $0x60] sm:$0xff]
        %v665 = vld [vmem:[#allocation8 + $0x68] sm:$0xff]
        %v666 = vld [vmem:[#allocation8 + $0x70] sm:$0xff]
        %v667 = vld [vmem:[#allocation8 + $0x78] sm:$0xff]
        %v668 = vld [vmem:[#allocation8 + $0x80] sm:$0xff]
        %v669 = vld [vmem:[#allocation8 + $0x88] sm:$0xff]
        %v670 = vld [vmem:[#allocation8 + $0x90] sm:$0xff]
        %v671 = vld [vmem:[#allocation8 + $0x98] sm:$0xff]
        %v672 = vld [vmem:[#allocation8 + $0xa0] sm:$0xff]
        %v673 = vld [vmem:[#allocation8 + $0xa8] sm:$0xff]
        %v674 = vld [vmem:[#allocation8 + $0xb0] sm:$0xff]
        %v675 = vld [vmem:[#allocation8 + $0xb8] sm:$0xff]
        %v676 = vld [vmem:[#allocation8 + $0xc0] sm:$0xff]
        %v677 = vld [vmem:[#allocation8 + $0xc8] sm:$0xff]
        %v678 = vld [vmem:[#allocation8 + $0xd0] sm:$0xff]
        %v679 = vld [vmem:[#allocation8 + $0xd8] sm:$0xff]
        %v680 = vld [vmem:[#allocation8 + $0xe0] sm:$0xff]
        %v681 = vld [vmem:[#allocation8 + $0xe8] sm:$0xff]
        %v682 = vld [vmem:[#allocation8 + $0xf0] sm:$0xff]
        %v683 = vld [vmem:[#allocation8 + $0xf8] sm:$0xff]
        %v684 = vld [vmem:[#allocation8 + $0x100] sm:$0xff]
        %v685 = vld [vmem:[#allocation8 + $0x108] sm:$0xff]
        %v686 = vld [vmem:[#allocation8 + $0x110] sm:$0xff]
        %v687 = vld [vmem:[#allocation8 + $0x118] sm:$0xff]
        %v688 = vld [vmem:[#allocation8 + $0x120] sm:$0xff]
        %v689 = vld [vmem:[#allocation8 + $0x128] sm:$0xff]
        %v690 = vld [vmem:[#allocation8 + $0x130] sm:$0xff]
        %v691 = vld [vmem:[#allocation8 + $0x138] sm:$0xff]
        %v692 = vld [vmem:[#allocation8 + $0x140] sm:$0xff]
        %v693 = vld [vmem:[#allocation8 + $0x148] sm:$0xff]
        %v694 = vld [vmem:[#allocation8 + $0x150] sm:$0xff]
        %v695 = vld [vmem:[#allocation8 + $0x158] sm:$0xff]
        %v696 = vld [vmem:[#allocation8 + $0x160] sm:$0xff]
        %v697 = vld [vmem:[#allocation8 + $0x168] sm:$0xff]
        %v698 = vld [vmem:[#allocation8 + $0x170] sm:$0xff]
        %v699 = vld [vmem:[#allocation8 + $0x178] sm:$0xff]
        %v700 = vld [vmem:[#allocation8 + $0x180] sm:$0xff]
        %v701 = vld [vmem:[#allocation8 + $0x188] sm:$0xff]
        %v702 = vld [vmem:[#allocation8 + $0x190] sm:$0xff]
        %v703 = vld [vmem:[#allocation8 + $0x198] sm:$0xff]
        %v704 = vld [vmem:[#allocation8 + $0x1a0] sm:$0xff]
        %v705 = vld [vmem:[#allocation8 + $0x1a8] sm:$0xff]
        %v706 = vld [vmem:[#allocation8 + $0x1b0] sm:$0xff]
        %v707 = vld [vmem:[#allocation8 + $0x1b8] sm:$0xff]
        %v708 = vld [vmem:[#allocation8 + $0x1c0] sm:$0xff]
        %v709 = vld [vmem:[#allocation8 + $0x1c8] sm:$0xff]
        %v710 = vld [vmem:[#allocation8 + $0x1d0] sm:$0xff]
        %v711 = vld [vmem:[#allocation8 + $0x1d8] sm:$0xff]
        %v712 = vld [vmem:[#allocation8 + $0x1e0] sm:$0xff]
        %v713 = vld [vmem:[#allocation8 + $0x1e8] sm:$0xff]
        %v714 = vld [vmem:[#allocation8 + $0x1f0] sm:$0xff]
        %v715 = vld [vmem:[#allocation8 + $0x1f8] sm:$0xff]
        %v716 = vld [vmem:[#allocation8 + $0x200] sm:$0xff]
        %v717 = vld [vmem:[#allocation8 + $0x208] sm:$0xff]
        %v718 = vld [vmem:[#allocation8 + $0x210] sm:$0xff]
        %v719 = vld [vmem:[#allocation8 + $0x218] sm:$0xff]
        %v720 = vld [vmem:[#allocation8 + $0x220] sm:$0xff]
        %v721 = vld [vmem:[#allocation8 + $0x228] sm:$0xff]
        %v722 = vld [vmem:[#allocation8 + $0x230] sm:$0xff]
        %v723 = vld [vmem:[#allocation8 + $0x238] sm:$0xff]
        %v724 = vld [vmem:[#allocation8 + $0x240] sm:$0xff]
        %v725 = vld [vmem:[#allocation8 + $0x248] sm:$0xff]
        %v726 = vld [vmem:[#allocation8 + $0x250] sm:$0xff]
        %v727 = vld [vmem:[#allocation8 + $0x258] sm:$0xff]
        %v728 = vld [vmem:[#allocation8 + $0x260] sm:$0xff]
        %v729 = vld [vmem:[#allocation8 + $0x268] sm:$0xff]
        %v730 = vld [vmem:[#allocation8 + $0x270] sm:$0xff]
        %v731 = vld [vmem:[#allocation8 + $0x278] sm:$0xff]
        %v732 = vld [vmem:[#allocation8 + $0x280] sm:$0xff]
        %v733 = vld [vmem:[#allocation8 + $0x288] sm:$0xff]
        %v734 = vld [vmem:[#allocation8 + $0x290] sm:$0xff]
        %v735 = vld [vmem:[#allocation8 + $0x298] sm:$0xff]
        %v736 = vld [vmem:[#allocation8 + $0x2a0] sm:$0xff]
        %v737 = vld [vmem:[#allocation8 + $0x2a8] sm:$0xff]
        %v738 = vld [vmem:[#allocation8 + $0x2b0] sm:$0xff]
        %v739 = vld [vmem:[#allocation8 + $0x2b8] sm:$0xff]
        %v740 = vld [vmem:[#allocation8 + $0x2c0] sm:$0xff]
        %v741 = vld [vmem:[#allocation8 + $0x2c8] sm:$0xff]
        %v742 = vld [vmem:[#allocation8 + $0x2d0] sm:$0xff]
        %v743 = vld [vmem:[#allocation8 + $0x2d8] sm:$0xff]
        %v744 = vld [vmem:[#allocation8 + $0x2e0] sm:$0xff]
        %v745 = vld [vmem:[#allocation8 + $0x2e8] sm:$0xff]
        %v746 = vld [vmem:[#allocation8 + $0x2f0] sm:$0xff]
        %v747 = vld [vmem:[#allocation8 + $0x2f8] sm:$0xff]
        %v748 = vld [vmem:[#allocation8 + $0x300] sm:$0xff]
        %v749 = vld [vmem:[#allocation8 + $0x308] sm:$0xff]
        %v750 = vld [vmem:[#allocation8 + $0x310] sm:$0xff]
        %v751 = vld [vmem:[#allocation8 + $0x318] sm:$0xff]
        %v752 = vld [vmem:[#allocation8 + $0x320] sm:$0xff]
        %v753 = vld [vmem:[#allocation8 + $0x328] sm:$0xff]
        %v754 = vld [vmem:[#allocation8 + $0x330] sm:$0xff]
        %v755 = vld [vmem:[#allocation8 + $0x338] sm:$0xff]
        %v756 = vld [vmem:[#allocation8 + $0x340] sm:$0xff]
        %v757 = vld [vmem:[#allocation8 + $0x348] sm:$0xff]
        %v758 = vld [vmem:[#allocation8 + $0x350] sm:$0xff]
        %v759 = vld [vmem:[#allocation8 + $0x358] sm:$0xff]
        %v760 = vld [vmem:[#allocation8 + $0x360] sm:$0xff]
        %v761 = vld [vmem:[#allocation8 + $0x368] sm:$0xff]
        %v762 = vld [vmem:[#allocation8 + $0x370] sm:$0xff]
        %v763 = vld [vmem:[#allocation8 + $0x378] sm:$0xff]
        %v764 = vld [vmem:[#allocation8 + $0x380] sm:$0xff]
        %v765 = vld [vmem:[#allocation8 + $0x388] sm:$0xff]
        %v766 = vld [vmem:[#allocation8 + $0x390] sm:$0xff]
        %v767 = vld [vmem:[#allocation8 + $0x398] sm:$0xff]
        %v768 = vld [vmem:[#allocation8 + $0x3a0] sm:$0xff]
        %v769 = vld [vmem:[#allocation8 + $0x3a8] sm:$0xff]
        %v770 = vld [vmem:[#allocation8 + $0x3b0] sm:$0xff]
        %v771 = vld [vmem:[#allocation8 + $0x3b8] sm:$0xff]
        %v772 = vld [vmem:[#allocation8 + $0x3c0] sm:$0xff]
        %v773 = vld [vmem:[#allocation8 + $0x3c8] sm:$0xff]
        %v774 = vld [vmem:[#allocation8 + $0x3d0] sm:$0xff]
        %v775 = vld [vmem:[#allocation8 + $0x3d8] sm:$0xff]
        %v776 = vld [vmem:[#allocation8 + $0x3e0] sm:$0xff]
        %v777 = vld [vmem:[#allocation8 + $0x3e8] sm:$0xff]
        %v778 = vld [vmem:[#allocation8 + $0x3f0] sm:$0xff]
        %v779 = vld [vmem:[#allocation8 + $0x3f8] sm:$0xff]
        %v780 = vpack.c.bf16 %v654, %v652
        %v781 = vpack.c.bf16 %v655, %v653
        %v782 = vpack.c.bf16 %v658, %v656
        %v783 = vpack.c.bf16 %v659, %v657
        %v784 = vpack.c.bf16 %v662, %v660
        %v785 = vpack.c.bf16 %v663, %v661
        %v786 = vpack.c.bf16 %v666, %v664
        %v787 = vpack.c.bf16 %v667, %v665
        %v788 = vpack.c.bf16 %v670, %v668
        %v789 = vpack.c.bf16 %v671, %v669
        %v790 = vpack.c.bf16 %v674, %v672
        %v791 = vpack.c.bf16 %v675, %v673
        %v792 = vpack.c.bf16 %v678, %v676
        %v793 = vpack.c.bf16 %v679, %v677
        %v794 = vpack.c.bf16 %v682, %v680
        %v795 = vpack.c.bf16 %v683, %v681
        %v796 = vpack.c.bf16 %v686, %v684
        %v797 = vpack.c.bf16 %v687, %v685
        %v798 = vpack.c.bf16 %v690, %v688
        %v799 = vpack.c.bf16 %v691, %v689
        %v800 = vpack.c.bf16 %v694, %v692
        %v801 = vpack.c.bf16 %v695, %v693
        %v802 = vpack.c.bf16 %v698, %v696
        %v803 = vpack.c.bf16 %v699, %v697
        %v804 = vpack.c.bf16 %v702, %v700
        %v805 = vpack.c.bf16 %v703, %v701
        %v806 = vpack.c.bf16 %v706, %v704
        %v807 = vpack.c.bf16 %v707, %v705
        %v808 = vpack.c.bf16 %v710, %v708
        %v809 = vpack.c.bf16 %v711, %v709
        %v810 = vpack.c.bf16 %v714, %v712
        %v811 = vpack.c.bf16 %v715, %v713
        %v812 = vpack.c.bf16 %v718, %v716
        %v813 = vpack.c.bf16 %v719, %v717
        %v814 = vpack.c.bf16 %v722, %v720
        %v815 = vpack.c.bf16 %v723, %v721
        %v816 = vpack.c.bf16 %v726, %v724
        %v817 = vpack.c.bf16 %v727, %v725
        %v818 = vpack.c.bf16 %v730, %v728
        %v819 = vpack.c.bf16 %v731, %v729
        %v820 = vpack.c.bf16 %v734, %v732
        %v821 = vpack.c.bf16 %v735, %v733
        %v822 = vpack.c.bf16 %v738, %v736
        %v823 = vpack.c.bf16 %v739, %v737
        %v824 = vpack.c.bf16 %v742, %v740
        %v825 = vpack.c.bf16 %v743, %v741
        %v826 = vpack.c.bf16 %v746, %v744
        %v827 = vpack.c.bf16 %v747, %v745
        %v828 = vpack.c.bf16 %v750, %v748
        %v829 = vpack.c.bf16 %v751, %v749
        %v830 = vpack.c.bf16 %v754, %v752
        %v831 = vpack.c.bf16 %v755, %v753
        %v832 = vpack.c.bf16 %v758, %v756
        %v833 = vpack.c.bf16 %v759, %v757
        %v834 = vpack.c.bf16 %v762, %v760
        %v835 = vpack.c.bf16 %v763, %v761
        %v836 = vpack.c.bf16 %v766, %v764
        %v837 = vpack.c.bf16 %v767, %v765
        %v838 = vpack.c.bf16 %v770, %v768
        %v839 = vpack.c.bf16 %v771, %v769
        %v840 = vpack.c.bf16 %v774, %v772
        %v841 = vpack.c.bf16 %v775, %v773
        %v842 = vpack.c.bf16 %v778, %v776
        %v843 = vpack.c.bf16 %v779, %v777
        %844 = vmatprep.subr.bf16.mxu0 %v781
        %845 = vmatpush1.bf16.msra.mxu0 %v780
        %846 = vmatprep.subr.bf16.mxu0 %v783
        %847 = vmatpush1.bf16.msra.mxu0 %v782
        %848 = vmatprep.subr.bf16.mxu0 %v785
        %849 = vmatpush1.bf16.msra.mxu0 %v784
        %850 = vmatprep.subr.bf16.mxu0 %v787
        %851 = vmatpush1.bf16.msra.mxu0 %v786
        %852 = vmatprep.subr.bf16.mxu0 %v789
        %853 = vmatpush1.bf16.msra.mxu0 %v788
        %854 = vmatprep.subr.bf16.mxu0 %v791
        %855 = vmatpush1.bf16.msra.mxu0 %v790
        %856 = vmatprep.subr.bf16.mxu0 %v793
        %857 = vmatpush1.bf16.msra.mxu0 %v792
        %858 = vmatprep.subr.bf16.mxu0 %v795
        %859 = vmatpush1.bf16.msra.mxu0 %v794
        %860 = vmatprep.subr.bf16.mxu0 %v797
        %861 = vmatpush1.bf16.msra.mxu0 %v796
        %862 = vmatprep.subr.bf16.mxu0 %v799
        %863 = vmatpush1.bf16.msra.mxu0 %v798
        %864 = vmatprep.subr.bf16.mxu0 %v801
        %865 = vmatpush1.bf16.msra.mxu0 %v800
        %866 = vmatprep.subr.bf16.mxu0 %v803
        %867 = vmatpush1.bf16.msra.mxu0 %v802
        %868 = vmatprep.subr.bf16.mxu0 %v805
        %869 = vmatpush1.bf16.msra.mxu0 %v804
        %870 = vmatprep.subr.bf16.mxu0 %v807
        %871 = vmatpush1.bf16.msra.mxu0 %v806
        %872 = vmatprep.subr.bf16.mxu0 %v809
        %873 = vmatpush1.bf16.msra.mxu0 %v808
        %874 = vmatprep.subr.bf16.mxu0 %v811
        %875 = vmatpush1.bf16.msra.mxu0 %v810
        %876 = vmatprep.mubr.bf16.mxu0 %v649
        %877 = vmatmul.mubr.bf16.gmra.mrb[0].mxu0 %v648
        %v878 = vpop.f32.mrb[0].mxu0
        %v879 = vadd.f32 0.0, %v878
        %v880 = vpop.f32.mrb[0].mxu0
        %v881 = vadd.f32 0.0, %v880
        %v882 = vpop.f32.mrb[0].mxu0
        %v883 = vpop.f32.mrb[0].mxu0
        %884 = vdwg.mxu0
        %885 = vmatprep.subr.bf16.mxu0 %v813
        %886 = vmatpush1.bf16.msra.mxu0 %v812
        %887 = vmatprep.subr.bf16.mxu0 %v815
        %888 = vmatpush1.bf16.msra.mxu0 %v814
        %889 = vmatprep.subr.bf16.mxu0 %v817
        %890 = vmatpush1.bf16.msra.mxu0 %v816
        %891 = vmatprep.subr.bf16.mxu0 %v819
        %892 = vmatpush1.bf16.msra.mxu0 %v818
        %893 = vmatprep.subr.bf16.mxu0 %v821
        %894 = vmatpush1.bf16.msra.mxu0 %v820
        %895 = vmatprep.subr.bf16.mxu0 %v823
        %896 = vmatpush1.bf16.msra.mxu0 %v822
        %897 = vmatprep.subr.bf16.mxu0 %v825
        %898 = vmatpush1.bf16.msra.mxu0 %v824
        %899 = vmatprep.subr.bf16.mxu0 %v827
        %900 = vmatpush1.bf16.msra.mxu0 %v826
        %901 = vmatprep.subr.bf16.mxu0 %v829
        %902 = vmatpush1.bf16.msra.mxu0 %v828
        %903 = vmatprep.subr.bf16.mxu0 %v831
        %904 = vmatpush1.bf16.msra.mxu0 %v830
        %905 = vmatprep.subr.bf16.mxu0 %v833
        %906 = vmatpush1.bf16.msra.mxu0 %v832
        %907 = vmatprep.subr.bf16.mxu0 %v835
        %908 = vmatpush1.bf16.msra.mxu0 %v834
        %909 = vmatprep.subr.bf16.mxu0 %v837
        %910 = vmatpush1.bf16.msra.mxu0 %v836
        %911 = vmatprep.subr.bf16.mxu0 %v839
        %912 = vmatpush1.bf16.msra.mxu0 %v838
        %913 = vmatprep.subr.bf16.mxu0 %v841
        %914 = vmatpush1.bf16.msra.mxu0 %v840
        %915 = vmatprep.subr.bf16.mxu0 %v843
        %916 = vmatpush1.bf16.msra.mxu0 %v842
        %917 = vmatprep.mubr.bf16.mxu0 %v651
        %918 = vmatmul.mubr.bf16.gmra.mrb[0].mxu0 %v650
        %v919 = vpop.f32.mrb[0].mxu0
        %v920 = vadd.f32 %v879, %v919
        %v921 = vpop.f32.mrb[0].mxu0
        %v922 = vadd.f32 %v881, %v921
        %v923 = vpop.f32.mrb[0].mxu0
        %v924 = vpop.f32.mrb[0].mxu0
        %925 = vdwg.mxu0
        %v926 = vadd.f32 %v646, %v920
        %v927 = vadd.f32 %v647, %v922
        %928 = vst [vmem:[#allocation2] sm:$0xff] %v926
        %929 = vst [vmem:[#allocation2 + $0x8] sm:$0xff] %v927
        // Predicated region
        $region57: #{tpu_custom_call.1} parent=39 // pred_check
          %p930 = pneg %p320
        $region58: #{tpu_custom_call.1} parent=39 // pred_check_branch
          %932 = sbr.rel (%p930) target = $region60
        $region59: #{tpu_custom_call.1} parent=39 // pred_region
          %v933 = vld [vmem:[#allocation2] sm:$0xff]
          %v934 = vld [vmem:[#allocation2 + $0x8] sm:$0xff]
          %v935 = vld [vmem:[%s4] sm:$0x3]
          %v937 = vlaneseq
          %v938 = vshrl.u32 %v937, 7
          %v939 = vsub.s32 0, %v938
          %v940 = vrot.slane %v935, %v939
          %v941 = vlaneseq
          %v942 = vshrl.u32 %v941, 7
          %v943 = vsub.s32 1, %v942
          %v944 = vrot.slane %v935, %v943
          %v947 = vadd.f32 %v933, %v940
          %v948 = vadd.f32 %v934, %v944
          %949 = vst [vmem:[%s312] sm:$0xff] %v947
          %950 = vst [vmem:[%s312 + $0x8] sm:$0xff] %v948
        $region60: #{tpu_custom_call.1} parent=39 // pred_fallthru
          _
        %s951 = sand.u32 %s168, 1
        %s952 = scalar_lea.sflag [#allocation5], %s951
        %s953 = sand.u32 %s168, 1
        %s954 = smul.addr %s953, 16
        %s955 = scalar_lea.vmem [#allocation9], %s954
        // Predicated region
        $region61: #{tpu_custom_call.1} parent=39 // pred_check
          %p956 = pneg %p178
        $region62: #{tpu_custom_call.1} parent=39 // pred_check_branch
          %958 = sbr.rel (%p956) target = $region64
        $region63: #{tpu_custom_call.1} parent=39 // pred_region
          %s960 = ssub.s32 256, 256
          %961 = vsyncadd %s952, %s960
          %s962 = smul.addr %s27, 2
          %s963 = smul.addr %s962, 128
          %s964 = scalar_lea.hbm %s5, %s963
          %s966 = sshll.u32 %s955, 4
          %s967 = int_to_ptr.vmem [resolvable:$true] %s966
          %969 = dma.vmem_to_hbm [thread:$0]  %s967, 256, %s964, %s952
        $region64: #{tpu_custom_call.1} parent=39 // pred_fallthru
          _
      $region40: #{tpu_custom_call.1} parent=5 // pred_fallthru
        _
      %p970 = scmp.le.s32.totalorder 2, %s18
      // Predicated region
      $region65: #{tpu_custom_call.1} parent=5 // pred_check
        %p971 = pneg %p970
      $region66: #{tpu_custom_call.1} parent=5 // pred_check_branch
        %973 = sbr.rel (%p971) target = $region68
      $region67: #{tpu_custom_call.1} parent=5 // pred_region
        %s974 = ssub.s32 %s18, 2
        // Predicated region
        $region69: #{tpu_custom_call.1} parent=67 // pred_check
          %p975 = pneg %p184
        $region70: #{tpu_custom_call.1} parent=67 // pred_check_branch
          %977 = sbr.rel (%p975) target = $region72
        $region71: #{tpu_custom_call.1} parent=67 // pred_region
          %s978 = sand.u32 %s169, 1
          %s979 = scalar_lea.sflag [#allocation5], %s978
          %s980 = sand.u32 %s169, 1
          %s981 = smul.addr %s980, 16
          %s982 = scalar_lea.vmem [#allocation9], %s981
          %983 = dma.done %s979, 256
        $region72: #{tpu_custom_call.1} parent=67 // pred_fallthru
          _
      $region68: #{tpu_custom_call.1} parent=5 // pred_fallthru
        _
    $region6: #{tpu_custom_call.1} parent=1 // loop_footer
      %s22 = sadd.s32 1, %s18
    $region7: #{tpu_custom_call.1} parent=1 // loop_footer_branch
      %17 = sbr.rel target = $region3
    $region8: #{tpu_custom_call.1} parent=1 // loop_exit
      _
    %984 = vsyncpa [#allocation4], 1
    %s985 = scalar_lea.sflag [#allocation4], 1
    %986 = vsyncpa %s985, 1
    %987 = vsyncpa [#allocation7], 1
    %988 = vsyncpa [#allocation5], 1
    %s989 = scalar_lea.sflag [#allocation5], 1
    %990 = vsyncpa %s989, 1

// kernel: tpu_custom_call.1
$region0: #{tpu_custom_call.1}
  #allocation0 [shape = 'u32[]', space=smem, size = 0x4, offset = 0x4, fixed_abs, tag = 'smem constant byte address 0x4 - core index']
  #allocation1 [shape = 'u32[144,128]{1,0:T(1,128)}', space=vmem, size = 0x12000, scoped, tag = 'internal scratch']
  #allocation2 [shape = 'f32[8,256]{1,0:T(8,128)}', space=vmem, size = 0x2000, scoped, tag = 'scratch operand']
  %s0 = inlined_call_operand.hbm [shape: f32[16,256], index: 0, kind: input, shape index: {}]
  %s1 = inlined_call_operand.hbm [shape: f32[256,512], index: 1, kind: input, shape index: {}]
  %s2 = inlined_call_operand.vmem [shape: f32[1,512], index: 2, kind: input, shape index: {}]
  %s3 = inlined_call_operand.hbm [shape: f32[512,256], index: 3, kind: input, shape index: {}]
  %s4 = inlined_call_operand.vmem [shape: f32[1,256], index: 4, kind: input, shape index: {}]
  %s5 = inlined_call_operand.hbm [shape: f32[16,256], index: 5, kind: output, shape index: {}]
  %s6 = sld [smem:[#allocation0]]
  $region73: #{tpu_custom_call.1} parent=0
    _
  %s8 = ssub.s32 1, %s6
  %s9 = scalar_select 0, %s8, %s6
  $region1: #{tpu_custom_call.1} parent=0
    #allocation3 [shape = 'u8[16384]{0}', space=vmem, size = 0x4000, scoped, tag = 'input window, operand 0']
    #allocation4 [shape = 's32[2]{0}', space=sflag, size = 0x8, scoped, tag = 'scoped memory for tpu_custom_call.1']
    #allocation5 [shape = 's32[2]{0}', space=sflag, size = 0x8, scoped, tag = 'scoped memory for tpu_custom_call.1']
    #allocation6 [shape = 'u8[524288]{0}', space=vmem, size = 0x80000, scoped, tag = 'input window, operand 1, single buffered']
    #allocation7 [shape = 's32[1]{0}', space=sflag, size = 0x4, scoped, tag = 'scoped memory for tpu_custom_call.1']
    #allocation8 [shape = 'u8[524288]{0}', space=vmem, size = 0x80000, scoped, tag = 'input window, operand 3, single buffered']
    #allocation9 [shape = 'u8[16384]{0}', space=vmem, size = 0x4000, scoped, tag = 'output window, operand 0']
    %10 = vsyncpa [#allocation4], 0
    %s11 = scalar_lea.sflag [#allocation4], 1
    %12 = vsyncpa %s11, 0
    %13 = vsyncpa [#allocation7], 0
    %14 = vsyncpa [#allocation5], 0
    %s15 = scalar_lea.sflag [#allocation5], 1
    %16 = vsyncpa %s15, 0
    loop: start=0, step=1, limit=4
    $region2: #{tpu_custom_call.1} parent=1 // loop_pre_header
      _
    $region3: #{tpu_custom_call.1} parent=1 // loop_header
      %s18 = sphi 0, %s22
      %p19 = scmp.ge.s32.totalorder %s18, 4
      %s25 = sphi 0, %s37
      %s26 = sphi 0, %s33
      %s27 = sphi 0, %s25
      %s28 = sphi 0, %s26
      %s29 = sphi 0, %s27
      %s30 = sphi 0, %s28
      %s40 = sphi 0, %s42
      %s43 = sphi 0, %s40
      %s44 = sphi 0, %s43
      %s60 = sphi 0, %s44
      %s66 = sphi 0, %s68
      %s69 = sphi 0, %s66
      %s70 = sphi 0, %s69
      %s86 = sphi 0, %s70
      %s92 = sphi 0, %s94
      %s95 = sphi 0, %s92
      %s96 = sphi 0, %s95
      %s112 = sphi 0, %s96
      %s118 = sphi 0, %s120
      %s121 = sphi 0, %s118
      %s122 = sphi 0, %s121
      %s138 = sphi 0, %s122
      %s142 = sphi 0, %s142
      %s144 = sphi 0, %s142
      %s145 = sphi 0, %s144
      %s159 = sphi 0, %s145
      %s165 = sphi 0, %s167
      %s168 = sphi 0, %s165
      %s169 = sphi 0, %s168
      %s185 = sphi 0, %s169
    $region4: #{tpu_custom_call.1} parent=1 // loop_header_branch
      %21 = sbr.rel (%p19) target = $region8
    $region5: #{tpu_custom_call.1} parent=1 // loop_body
      %s23 = ssub.s32 %s18, 1
      %s24 = ssub.s32 %s18, 2
      %s31 = sadd.s32 1, %s26
      %p32 = scmp.ge.s32.totalorder %s31, 1
      %s33 = scalar_select %p32, 0, %s31
      %s34 = sadd.s32 1, %s25
      %s35 = scalar_select %p32, %s34, %s25
      %p36 = scmp.ge.s32.totalorder %s35, 2
      %s37 = scalar_select %p36, 0, %s35
      %s38 = ssub.s32 %s25, %s37
      %p39 = scmp.eq.s32.totalorder %s38, 0
      %s41 = sadd.s32 %s40, 1
      %s42 = scalar_select %p39, %s40, %s41
      %p45 = pneg %p39
      %p46 = scmp.eq.s32.totalorder %s18, 1
      %p47 = por %p45, %p46
      %p48 = scmp.ne.s32.totalorder %s40, %s43
      %p49 = scmp.eq.s32.totalorder %s18, 0
      %p50 = por %p48, %p49
      %p51 = scmp.ne.s32.totalorder %s40, %s43
      %p52 = scmp.eq.s32.totalorder %s23, 1
      %p53 = por %p51, %p52
      %p54 = scmp.ne.s32.totalorder %s43, %s44
      %p55 = scmp.eq.s32.totalorder %s23, 0
      %p56 = por %p54, %p55
      %p57 = scmp.ne.s32.totalorder %s43, %s44
      %p58 = scmp.eq.s32.totalorder %s24, 1
      %p59 = por %p57, %p58
      %p61 = scmp.ne.s32.totalorder %s44, %s60
      %p62 = scmp.eq.s32.totalorder %s24, 0
      %p63 = por %p61, %p62
      %s64 = ssub.s32 %s26, %s33
      %p65 = scmp.eq.s32.totalorder %s64, 0
      %s67 = sadd.s32 %s66, 1
      %s68 = scalar_select %p65, %s66, %s67
      %p71 = pneg %p65
      %p72 = scmp.eq.s32.totalorder %s18, 1
      %p73 = por %p71, %p72
      %p74 = scmp.ne.s32.totalorder %s66, %s69
      %p75 = scmp.eq.s32.totalorder %s18, 0
      %p76 = por %p74, %p75
      %p77 = scmp.ne.s32.totalorder %s66, %s69
      %p78 = scmp.eq.s32.totalorder %s23, 1
      %p79 = por %p77, %p78
      %p80 = scmp.ne.s32.totalorder %s69, %s70
      %p81 = scmp.eq.s32.totalorder %s23, 0
      %p82 = por %p80, %p81
      %p83 = scmp.ne.s32.totalorder %s69, %s70
      %p84 = scmp.eq.s32.totalorder %s24, 1
      %p85 = por %p83, %p84
      %p87 = scmp.ne.s32.totalorder %s70, %s86
      %p88 = scmp.eq.s32.totalorder %s24, 0
      %p89 = por %p87, %p88
      %s90 = ssub.s32 %s26, %s33
      %p91 = scmp.eq.s32.totalorder %s90, 0
      %s93 = sadd.s32 %s92, 1
      %s94 = scalar_select %p91, %s92, %s93
      %p97 = pneg %p91
      %p98 = scmp.eq.s32.totalorder %s18, 1
      %p99 = por %p97, %p98
      %p100 = scmp.ne.s32.totalorder %s92, %s95
      %p101 = scmp.eq.s32.totalorder %s18, 0
      %p102 = por %p100, %p101
      %p103 = scmp.ne.s32.totalorder %s92, %s95
      %p104 = scmp.eq.s32.totalorder %s23, 1
      %p105 = por %p103, %p104
      %p106 = scmp.ne.s32.totalorder %s95, %s96
      %p107 = scmp.eq.s32.totalorder %s23, 0
      %p108 = por %p106, %p107
      %p109 = scmp.ne.s32.totalorder %s95, %s96
      %p110 = scmp.eq.s32.totalorder %s24, 1
      %p111 = por %p109, %p110
      %p113 = scmp.ne.s32.totalorder %s96, %s112
      %p114 = scmp.eq.s32.totalorder %s24, 0
      %p115 = por %p113, %p114
      %s116 = ssub.s32 %s26, %s33
      %p117 = scmp.eq.s32.totalorder %s116, 0
      %s119 = sadd.s32 %s118, 1
      %s120 = scalar_select %p117, %s118, %s119
      %p123 = pneg %p117
      %p124 = scmp.eq.s32.totalorder %s18, 1
      %p125 = por %p123, %p124
      %p126 = scmp.ne.s32.totalorder %s118, %s121
      %p127 = scmp.eq.s32.totalorder %s18, 0
      %p128 = por %p126, %p127
      %p129 = scmp.ne.s32.totalorder %s118, %s121
      %p130 = scmp.eq.s32.totalorder %s23, 1
      %p131 = por %p129, %p130
      %p132 = scmp.ne.s32.totalorder %s121, %s122
      %p133 = scmp.eq.s32.totalorder %s23, 0
      %p134 = por %p132, %p133
      %p135 = scmp.ne.s32.totalorder %s121, %s122
      %p136 = scmp.eq.s32.totalorder %s24, 1
      %p137 = por %p135, %p136
      %p139 = scmp.ne.s32.totalorder %s122, %s138
      %p140 = scmp.eq.s32.totalorder %s24, 0
      %p141 = por %p139, %p140
      %s143 = sadd.s32 %s142, 1
      %p146 = scmp.eq.s32.totalorder %s18, 1
      %p147 = scmp.ne.s32.totalorder %s142, %s144
      %p148 = scmp.eq.s32.totalorder %s18, 0
      %p149 = por %p147, %p148
      %p150 = scmp.ne.s32.totalorder %s142, %s144
      %p151 = scmp.eq.s32.totalorder %s23, 1
      %p152 = por %p150, %p151
      %p153 = scmp.ne.s32.totalorder %s144, %s145
      %p154 = scmp.eq.s32.totalorder %s23, 0
      %p155 = por %p153, %p154
      %p156 = scmp.ne.s32.totalorder %s144, %s145
      %p157 = scmp.eq.s32.totalorder %s24, 1
      %p158 = por %p156, %p157
      %p160 = scmp.ne.s32.totalorder %s145, %s159
      %p161 = scmp.eq.s32.totalorder %s24, 0
      %p162 = por %p160, %p161
      %s163 = ssub.s32 %s25, %s37
      %p164 = scmp.eq.s32.totalorder %s163, 0
      %s166 = sadd.s32 %s165, 1
      %s167 = scalar_select %p164, %s165, %s166
      %p170 = pneg %p164
      %p171 = scmp.eq.s32.totalorder %s18, 1
      %p172 = por %p170, %p171
      %p173 = scmp.ne.s32.totalorder %s165, %s168
      %p174 = scmp.eq.s32.totalorder %s18, 0
      %p175 = por %p173, %p174
      %p176 = scmp.ne.s32.totalorder %s165, %s168
      %p177 = scmp.eq.s32.totalorder %s23, 1
      %p178 = por %p176, %p177
      %p179 = scmp.ne.s32.totalorder %s168, %s169
      %p180 = scmp.eq.s32.totalorder %s23, 0
      %p181 = por %p179, %p180
      %p182 = scmp.ne.s32.totalorder %s168, %s169
      %p183 = scmp.eq.s32.totalorder %s24, 1
      %p184 = por %p182, %p183
      %p186 = scmp.ne.s32.totalorder %s169, %s185
      %p187 = scmp.eq.s32.totalorder %s24, 0
      %p188 = por %p186, %p187
      %p189 = scmp.le.s32.totalorder 1, %s18
      %p190 = scmp.lt.s32.totalorder %s18, 3
      %p191 = pnand %p189, %p190
      %p192 = pneg %p191
      // Predicated region
      $region9: #{tpu_custom_call.1} parent=5 // pred_check
        _
      $region10: #{tpu_custom_call.1} parent=5 // pred_check_branch
        %194 = sbr.rel (%p191) target = $region12
      $region11: #{tpu_custom_call.1} parent=5 // pred_region
        %s195 = ssub.s32 %s18, 1
        // Predicated region
        $region13: #{tpu_custom_call.1} parent=11 // pred_check
          %p196 = pneg %p82
        $region14: #{tpu_custom_call.1} parent=11 // pred_check_branch
          %198 = sbr.rel (%p196) target = $region16
        $region15: #{tpu_custom_call.1} parent=11 // pred_region
          %s199 = smul.u32 4, %s28
          %s201 = ssub.s32 16384, 16384
          %202 = vsyncadd [#allocation7], %s201
          %s203 = smul.addr %s199, 128
          %s204 = scalar_lea.hbm %s1, %s203
          %s205 = sshll.u32 [#allocation6], 4
          %s206 = int_to_ptr.vmem [resolvable:$true] %s205
          %211 = dma.hbm_to_vmem [thread:$0]  %s204, 16384, %s206, [#allocation7], 512, 512, 32
        $region16: #{tpu_custom_call.1} parent=11 // pred_fallthru
          _
        // Predicated region
        $region17: #{tpu_custom_call.1} parent=11 // pred_check
          %p212 = pneg %p108
        $region18: #{tpu_custom_call.1} parent=11 // pred_check_branch
          %214 = sbr.rel (%p212) target = $region20
        $region19: #{tpu_custom_call.1} parent=11 // pred_region
          %s215 = smul.u32 4, %s28
          %p216 = scmp.lt.s32.totalorder %s215, 3
          %s217 = scalar_select %p216, %s215, 3
          %s218 = scalar_lea.vmem %s2, %s217
          %s219 = smul.u32 4, %s28
        $region20: #{tpu_custom_call.1} parent=11 // pred_fallthru
          _
        // Predicated region
        $region21: #{tpu_custom_call.1} parent=11 // pred_check
          %p220 = pneg %p134
        $region22: #{tpu_custom_call.1} parent=11 // pred_check_branch
          %222 = sbr.rel (%p220) target = $region24
        $region23: #{tpu_custom_call.1} parent=11 // pred_region
          %s223 = smul.u32 64, %s28
          %s225 = ssub.s32 16384, 16384
          %226 = vsyncadd [#allocation7], %s225
          %s227 = smul.addr %s223, 2
          %s228 = smul.addr %s227, 128
          %s229 = scalar_lea.hbm %s3, %s228
          %s230 = sshll.u32 [#allocation8], 4
          %s231 = int_to_ptr.vmem [resolvable:$true] %s230
          %236 = dma.hbm_to_vmem [thread:$0]  %s229, 16384, %s231, [#allocation7], 256, 256, 16
        $region24: #{tpu_custom_call.1} parent=11 // pred_fallthru
          _
        // Predicated region
        $region25: #{tpu_custom_call.1} parent=11 // pred_check
          %p237 = pneg %p155
        $region26: #{tpu_custom_call.1} parent=11 // pred_check_branch
          %239 = sbr.rel (%p237) target = $region28
        $region27: #{tpu_custom_call.1} parent=11 // pred_region
          _
        $region28: #{tpu_custom_call.1} parent=11 // pred_fallthru
          _
      $region12: #{tpu_custom_call.1} parent=5 // pred_fallthru
        _
      %p240 = scmp.lt.s32.totalorder %s18, 2
      // Predicated region
      $region29: #{tpu_custom_call.1} parent=5 // pred_check
        %p241 = pneg %p240
      $region30: #{tpu_custom_call.1} parent=5 // pred_check_branch
        %243 = sbr.rel (%p241) target = $region32
      $region31: #{tpu_custom_call.1} parent=5 // pred_region
        // Predicated region
        $region33: #{tpu_custom_call.1} parent=31 // pred_check
          %p244 = pneg %p50
        $region34: #{tpu_custom_call.1} parent=31 // pred_check_branch
          %246 = sbr.rel (%p244) target = $region36
        $region35: #{tpu_custom_call.1} parent=31 // pred_region
          %s247 = sand.u32 %s40, 1
          %s248 = scalar_lea.sflag [#allocation4], %s247
          %s249 = sand.u32 %s40, 1
          %s250 = smul.addr %s249, 16
          %s251 = scalar_lea.vmem [#allocation3], %s250
          %s253 = ssub.s32 256, 256
          %254 = vsyncadd %s248, %s253
          %s255 = smul.addr %s25, 2
          %s256 = smul.addr %s255, 128
          %s257 = scalar_lea.hbm %s0, %s256
          %s259 = sshll.u32 %s251, 4
          %s260 = int_to_ptr.vmem [resolvable:$true] %s259
          %262 = dma.hbm_to_vmem [thread:$0]  %s257, 256, %s260, %s248
        $region36: #{tpu_custom_call.1} parent=31 // pred_fallthru
          _
      $region32: #{tpu_custom_call.1} parent=5 // pred_fallthru
        _
      %p263 = scmp.le.s32.totalorder 1, %s18
      %p264 = scmp.lt.s32.totalorder %s18, 3
      %p265 = pnand %p263, %p264
      %p266 = pneg %p265
      // Predicated region
      $region37: #{tpu_custom_call.1} parent=5 // pred_check
        _
      $region38: #{tpu_custom_call.1} parent=5 // pred_check_branch
        %268 = sbr.rel (%p265) target = $region40
      $region39: #{tpu_custom_call.1} parent=5 // pred_region
        %s269 = ssub.s32 %s18, 1
        %s270 = sand.u32 %s43, 1
        %s271 = scalar_lea.sflag [#allocation4], %s270
        %s272 = sand.u32 %s43, 1
        %s273 = smul.addr %s272, 16
        %s274 = scalar_lea.vmem [#allocation3], %s273
        // Predicated region
        $region41: #{tpu_custom_call.1} parent=39 // pred_check
          %p275 = pneg %p56
        $region42: #{tpu_custom_call.1} parent=39 // pred_check_branch
          %277 = sbr.rel (%p275) target = $region44
        $region43: #{tpu_custom_call.1} parent=39 // pred_region
          %278 = dma.done %s271, 256
        $region44: #{tpu_custom_call.1} parent=39 // pred_fallthru
          _
        // Predicated region
        $region45: #{tpu_custom_call.1} parent=39 // pred_check
          %p279 = pneg %p82
        $region46: #{tpu_custom_call.1} parent=39 // pred_check_branch
          %281 = sbr.rel (%p279) target = $region48
        $region47: #{tpu_custom_call.1} parent=39 // pred_region
          %282 = dma.done [#allocation7], 16384
        $region48: #{tpu_custom_call.1} parent=39 // pred_fallthru
          _
        // Predicated region
        $region49: #{tpu_custom_call.1} parent=39 // pred_check
          %p283 = pneg %p134
        $region50: #{tpu_custom_call.1} parent=39 // pred_check_branch
          %285 = sbr.rel (%p283) target = $region52
        $region51: #{tpu_custom_call.1} parent=39 // pred_region
          %286 = dma.done [#allocation7], 16384
        $region52: #{tpu_custom_call.1} parent=39 // pred_fallthru
          _
        %s287 = sand.u32 %s43, 1
        %s288 = scalar_lea.sflag [#allocation4], %s287
        %s289 = sand.u32 %s43, 1
        %s290 = smul.addr %s289, 16
        %s291 = scalar_lea.vmem [#allocation3], %s290
        %p292 = pneg %p56
        %p293 = pneg %p53
        %p294 = pneg %p82
        %p295 = pneg %p79
        %s296 = smul.u32 4, %s28
        %p297 = scmp.lt.s32.totalorder %s296, 3
        %s298 = scalar_select %p297, %s296, 3
        %s299 = scalar_lea.vmem %s2, %s298
        %p300 = pneg %p108
        %p301 = pneg %p105
        %p302 = pneg %p134
        %p303 = pneg %p131
        %p304 = pneg %p155
        %p305 = pneg %p152
        %p306 = pneg %p181
        %p307 = pneg %p178
        %s308 = sand.u32 %s168, 1
        %s309 = scalar_lea.sflag [#allocation5], %s308
        %s310 = sand.u32 %s168, 1
        %s311 = smul.addr %s310, 16
        %s312 = scalar_lea.vmem [#allocation9], %s311
        %s313 = smul.u32 4, %s28
        %s314 = smul.u32 4, %s28
        %p315 = scmp.lt.s32.totalorder %s314, 3
        %s316 = scalar_select %p315, %s314, 3
        %s317 = scalar_lea.vmem %s2, %s316
        %s318 = smul.u32 4, %s28
        %s319 = smul.u32 64, %s28
        %p320 = scmp.eq.s32.totalorder %s28, 0
        // Predicated region
        $region53: #{tpu_custom_call.1} parent=39 // pred_check
          %p321 = pneg %p320
        $region54: #{tpu_custom_call.1} parent=39 // pred_check_branch
          %323 = sbr.rel (%p321) target = $region56
        $region55: #{tpu_custom_call.1} parent=39 // pred_region
          %324 = vst [vmem:[#allocation2] sm:$0xff] 0.0
          %325 = vst [vmem:[#allocation2 + $0x8] sm:$0xff] 0.0
        $region56: #{tpu_custom_call.1} parent=39 // pred_fallthru
          _
        %v326 = vld [vmem:[%s274] sm:$0xff]
        %v327 = vld [vmem:[%s274 + $0x8] sm:$0xff]
        %v328 = vpack.c.bf16 %v326, %v326
        %v329 = vpack.c.bf16 %v327, %v327
        %v330 = vld [vmem:[#allocation6] sm:$0xff]
        %v331 = vld [vmem:[#allocation6 + $0x8] sm:$0xff]
        %v332 = vld [vmem:[#allocation6 + $0x10] sm:$0xff]
        %v333 = vld [vmem:[#allocation6 + $0x18] sm:$0xff]
        %v334 = vld [vmem:[#allocation6 + $0x20] sm:$0xff]
        %v335 = vld [vmem:[#allocation6 + $0x28] sm:$0xff]
        %v336 = vld [vmem:[#allocation6 + $0x30] sm:$0xff]
        %v337 = vld [vmem:[#allocation6 + $0x38] sm:$0xff]
        %v338 = vld [vmem:[#allocation6 + $0x40] sm:$0xff]
        %v339 = vld [vmem:[#allocation6 + $0x48] sm:$0xff]
        %v340 = vld [vmem:[#allocation6 + $0x50] sm:$0xff]
        %v341 = vld [vmem:[#allocation6 + $0x58] sm:$0xff]
        %v342 = vld [vmem:[#allocation6 + $0x60] sm:$0xff]
        %v343 = vld [vmem:[#allocation6 + $0x68] sm:$0xff]
        %v344 = vld [vmem:[#allocation6 + $0x70] sm:$0xff]
        %v345 = vld [vmem:[#allocation6 + $0x78] sm:$0xff]
        %v346 = vld [vmem:[#allocation6 + $0x80] sm:$0xff]
        %v347 = vld [vmem:[#allocation6 + $0x88] sm:$0xff]
        %v348 = vld [vmem:[#allocation6 + $0x90] sm:$0xff]
        %v349 = vld [vmem:[#allocation6 + $0x98] sm:$0xff]
        %v350 = vld [vmem:[#allocation6 + $0xa0] sm:$0xff]
        %v351 = vld [vmem:[#allocation6 + $0xa8] sm:$0xff]
        %v352 = vld [vmem:[#allocation6 + $0xb0] sm:$0xff]
        %v353 = vld [vmem:[#allocation6 + $0xb8] sm:$0xff]
        %v354 = vld [vmem:[#allocation6 + $0xc0] sm:$0xff]
        %v355 = vld [vmem:[#allocation6 + $0xc8] sm:$0xff]
        %v356 = vld [vmem:[#allocation6 + $0xd0] sm:$0xff]
        %v357 = vld [vmem:[#allocation6 + $0xd8] sm:$0xff]
        %v358 = vld [vmem:[#allocation6 + $0xe0] sm:$0xff]
        %v359 = vld [vmem:[#allocation6 + $0xe8] sm:$0xff]
        %v360 = vld [vmem:[#allocation6 + $0xf0] sm:$0xff]
        %v361 = vld [vmem:[#allocation6 + $0xf8] sm:$0xff]
        %v362 = vld [vmem:[#allocation6 + $0x100] sm:$0xff]
        %v363 = vld [vmem:[#allocation6 + $0x108] sm:$0xff]
        %v364 = vld [vmem:[#allocation6 + $0x110] sm:$0xff]
        %v365 = vld [vmem:[#allocation6 + $0x118] sm:$0xff]
        %v366 = vld [vmem:[#allocation6 + $0x120] sm:$0xff]
        %v367 = vld [vmem:[#allocation6 + $0x128] sm:$0xff]
        %v368 = vld [vmem:[#allocation6 + $0x130] sm:$0xff]
        %v369 = vld [vmem:[#allocation6 + $0x138] sm:$0xff]
        %v370 = vld [vmem:[#allocation6 + $0x140] sm:$0xff]
        %v371 = vld [vmem:[#allocation6 + $0x148] sm:$0xff]
        %v372 = vld [vmem:[#allocation6 + $0x150] sm:$0xff]
        %v373 = vld [vmem:[#allocation6 + $0x158] sm:$0xff]
        %v374 = vld [vmem:[#allocation6 + $0x160] sm:$0xff]
        %v375 = vld [vmem:[#allocation6 + $0x168] sm:$0xff]
        %v376 = vld [vmem:[#allocation6 + $0x170] sm:$0xff]
        %v377 = vld [vmem:[#allocation6 + $0x178] sm:$0xff]
        %v378 = vld [vmem:[#allocation6 + $0x180] sm:$0xff]
        %v379 = vld [vmem:[#allocation6 + $0x188] sm:$0xff]
        %v380 = vld [vmem:[#allocation6 + $0x190] sm:$0xff]
        %v381 = vld [vmem:[#allocation6 + $0x198] sm:$0xff]
        %v382 = vld [vmem:[#allocation6 + $0x1a0] sm:$0xff]
        %v383 = vld [vmem:[#allocation6 + $0x1a8] sm:$0xff]
        %v384 = vld [vmem:[#allocation6 + $0x1b0] sm:$0xff]
        %v385 = vld [vmem:[#allocation6 + $0x1b8] sm:$0xff]
        %v386 = vld [vmem:[#allocation6 + $0x1c0] sm:$0xff]
        %v387 = vld [vmem:[#allocation6 + $0x1c8] sm:$0xff]
        %v388 = vld [vmem:[#allocation6 + $0x1d0] sm:$0xff]
        %v389 = vld [vmem:[#allocation6 + $0x1d8] sm:$0xff]
        %v390 = vld [vmem:[#allocation6 + $0x1e0] sm:$0xff]
        %v391 = vld [vmem:[#allocation6 + $0x1e8] sm:$0xff]
        %v392 = vld [vmem:[#allocation6 + $0x1f0] sm:$0xff]
        %v393 = vld [vmem:[#allocation6 + $0x1f8] sm:$0xff]
        %v394 = vld [vmem:[#allocation6 + $0x200] sm:$0xff]
        %v395 = vld [vmem:[#allocation6 + $0x208] sm:$0xff]
        %v396 = vld [vmem:[#allocation6 + $0x210] sm:$0xff]
        %v397 = vld [vmem:[#allocation6 + $0x218] sm:$0xff]
        %v398 = vld [vmem:[#allocation6 + $0x220] sm:$0xff]
        %v399 = vld [vmem:[#allocation6 + $0x228] sm:$0xff]
        %v400 = vld [vmem:[#allocation6 + $0x230] sm:$0xff]
        %v401 = vld [vmem:[#allocation6 + $0x238] sm:$0xff]
        %v402 = vld [vmem:[#allocation6 + $0x240] sm:$0xff]
        %v403 = vld [vmem:[#allocation6 + $0x248] sm:$0xff]
        %v404 = vld [vmem:[#allocation6 + $0x250] sm:$0xff]
        %v405 = vld [vmem:[#allocation6 + $0x258] sm:$0xff]
        %v406 = vld [vmem:[#allocation6 + $0x260] sm:$0xff]
        %v407 = vld [vmem:[#allocation6 + $0x268] sm:$0xff]
        %v408 = vld [vmem:[#allocation6 + $0x270] sm:$0xff]
        %v409 = vld [vmem:[#allocation6 + $0x278] sm:$0xff]
        %v410 = vld [vmem:[#allocation6 + $0x280] sm:$0xff]
        %v411 = vld [vmem:[#allocation6 + $0x288] sm:$0xff]
        %v412 = vld [vmem:[#allocation6 + $0x290] sm:$0xff]
        %v413 = vld [vmem:[#allocation6 + $0x298] sm:$0xff]
        %v414 = vld [vmem:[#allocation6 + $0x2a0] sm:$0xff]
        %v415 = vld [vmem:[#allocation6 + $0x2a8] sm:$0xff]
        %v416 = vld [vmem:[#allocation6 + $0x2b0] sm:$0xff]
        %v417 = vld [vmem:[#allocation6 + $0x2b8] sm:$0xff]
        %v418 = vld [vmem:[#allocation6 + $0x2c0] sm:$0xff]
        %v419 = vld [vmem:[#allocation6 + $0x2c8] sm:$0xff]
        %v420 = vld [vmem:[#allocation6 + $0x2d0] sm:$0xff]
        %v421 = vld [vmem:[#allocation6 + $0x2d8] sm:$0xff]
        %v422 = vld [vmem:[#allocation6 + $0x2e0] sm:$0xff]
        %v423 = vld [vmem:[#allocation6 + $0x2e8] sm:$0xff]
        %v424 = vld [vmem:[#allocation6 + $0x2f0] sm:$0xff]
        %v425 = vld [vmem:[#allocation6 + $0x2f8] sm:$0xff]
        %v426 = vld [vmem:[#allocation6 + $0x300] sm:$0xff]
        %v427 = vld [vmem:[#allocation6 + $0x308] sm:$0xff]
        %v428 = vld [vmem:[#allocation6 + $0x310] sm:$0xff]
        %v429 = vld [vmem:[#allocation6 + $0x318] sm:$0xff]
        %v430 = vld [vmem:[#allocation6 + $0x320] sm:$0xff]
        %v431 = vld [vmem:[#allocation6 + $0x328] sm:$0xff]
        %v432 = vld [vmem:[#allocation6 + $0x330] sm:$0xff]
        %v433 = vld [vmem:[#allocation6 + $0x338] sm:$0xff]
        %v434 = vld [vmem:[#allocation6 + $0x340] sm:$0xff]
        %v435 = vld [vmem:[#allocation6 + $0x348] sm:$0xff]
        %v436 = vld [vmem:[#allocation6 + $0x350] sm:$0xff]
        %v437 = vld [vmem:[#allocation6 + $0x358] sm:$0xff]
        %v438 = vld [vmem:[#allocation6 + $0x360] sm:$0xff]
        %v439 = vld [vmem:[#allocation6 + $0x368] sm:$0xff]
        %v440 = vld [vmem:[#allocation6 + $0x370] sm:$0xff]
        %v441 = vld [vmem:[#allocation6 + $0x378] sm:$0xff]
        %v442 = vld [vmem:[#allocation6 + $0x380] sm:$0xff]
        %v443 = vld [vmem:[#allocation6 + $0x388] sm:$0xff]
        %v444 = vld [vmem:[#allocation6 + $0x390] sm:$0xff]
        %v445 = vld [vmem:[#allocation6 + $0x398] sm:$0xff]
        %v446 = vld [vmem:[#allocation6 + $0x3a0] sm:$0xff]
        %v447 = vld [vmem:[#allocation6 + $0x3a8] sm:$0xff]
        %v448 = vld [vmem:[#allocation6 + $0x3b0] sm:$0xff]
        %v449 = vld [vmem:[#allocation6 + $0x3b8] sm:$0xff]
        %v450 = vld [vmem:[#allocation6 + $0x3c0] sm:$0xff]
        %v451 = vld [vmem:[#allocation6 + $0x3c8] sm:$0xff]
        %v452 = vld [vmem:[#allocation6 + $0x3d0] sm:$0xff]
        %v453 = vld [vmem:[#allocation6 + $0x3d8] sm:$0xff]
        %v454 = vld [vmem:[#allocation6 + $0x3e0] sm:$0xff]
        %v455 = vld [vmem:[#allocation6 + $0x3e8] sm:$0xff]
        %v456 = vld [vmem:[#allocation6 + $0x3f0] sm:$0xff]
        %v457 = vld [vmem:[#allocation6 + $0x3f8] sm:$0xff]
        %v458 = vpack.c.bf16 %v334, %v330
        %v459 = vpack.c.bf16 %v335, %v331
        %v460 = vpack.c.bf16 %v336, %v332
        %v461 = vpack.c.bf16 %v337, %v333
        %v462 = vpack.c.bf16 %v342, %v338
        %v463 = vpack.c.bf16 %v343, %v339
        %v464 = vpack.c.bf16 %v344, %v340
        %v465 = vpack.c.bf16 %v345, %v341
        %v466 = vpack.c.bf16 %v350, %v346
        %v467 = vpack.c.bf16 %v351, %v347
        %v468 = vpack.c.bf16 %v352, %v348
        %v469 = vpack.c.bf16 %v353, %v349
        %v470 = vpack.c.bf16 %v358, %v354
        %v471 = vpack.c.bf16 %v359, %v355
        %v472 = vpack.c.bf16 %v360, %v356
        %v473 = vpack.c.bf16 %v361, %v357
        %v474 = vpack.c.bf16 %v366, %v362
        %v475 = vpack.c.bf16 %v367, %v363
        %v476 = vpack.c.bf16 %v368, %v364
        %v477 = vpack.c.bf16 %v369, %v365
        %v478 = vpack.c.bf16 %v374, %v370
        %v479 = vpack.c.bf16 %v375, %v371
        %v480 = vpack.c.bf16 %v376, %v372
        %v481 = vpack.c.bf16 %v377, %v373
        %v482 = vpack.c.bf16 %v382, %v378
        %v483 = vpack.c.bf16 %v383, %v379
        %v484 = vpack.c.bf16 %v384, %v380
        %v485 = vpack.c.bf16 %v385, %v381
        %v486 = vpack.c.bf16 %v390, %v386
        %v487 = vpack.c.bf16 %v391, %v387
        %v488 = vpack.c.bf16 %v392, %v388
        %v489 = vpack.c.bf16 %v393, %v389
        %v490 = vpack.c.bf16 %v398, %v394
        %v491 = vpack.c.bf16 %v399, %v395
        %v492 = vpack.c.bf16 %v400, %v396
        %v493 = vpack.c.bf16 %v401, %v397
        %v494 = vpack.c.bf16 %v406, %v402
        %v495 = vpack.c.bf16 %v407, %v403
        %v496 = vpack.c.bf16 %v408, %v404
        %v497 = vpack.c.bf16 %v409, %v405
        %v498 = vpack.c.bf16 %v414, %v410
        %v499 = vpack.c.bf16 %v415, %v411
        %v500 = vpack.c.bf16 %v416, %v412
        %v501 = vpack.c.bf16 %v417, %v413
        %v502 = vpack.c.bf16 %v422, %v418
        %v503 = vpack.c.bf16 %v423, %v419
        %v504 = vpack.c.bf16 %v424, %v420
        %v505 = vpack.c.bf16 %v425, %v421
        %v506 = vpack.c.bf16 %v430, %v426
        %v507 = vpack.c.bf16 %v431, %v427
        %v508 = vpack.c.bf16 %v432, %v428
        %v509 = vpack.c.bf16 %v433, %v429
        %v510 = vpack.c.bf16 %v438, %v434
        %v511 = vpack.c.bf16 %v439, %v435
        %v512 = vpack.c.bf16 %v440, %v436
        %v513 = vpack.c.bf16 %v441, %v437
        %v514 = vpack.c.bf16 %v446, %v442
        %v515 = vpack.c.bf16 %v447, %v443
        %v516 = vpack.c.bf16 %v448, %v444
        %v517 = vpack.c.bf16 %v449, %v445
        %v518 = vpack.c.bf16 %v454, %v450
        %v519 = vpack.c.bf16 %v455, %v451
        %v520 = vpack.c.bf16 %v456, %v452
        %v521 = vpack.c.bf16 %v457, %v453
        %v522 = vld [vmem:[%s317] sm:$0xf]
        %v524 = vlaneseq
        %v525 = vshrl.u32 %v524, 7
        %v526 = vsub.s32 0, %v525
        %v527 = vrot.slane %v522, %v526
        %v528 = vlaneseq
        %v529 = vshrl.u32 %v528, 7
        %v530 = vsub.s32 1, %v529
        %v531 = vrot.slane %v522, %v530
        %v532 = vlaneseq
        %v533 = vshrl.u32 %v532, 7
        %v534 = vsub.s32 2, %v533
        %v535 = vrot.slane %v522, %v534
        %v536 = vlaneseq
        %v537 = vshrl.u32 %v536, 7
        %v538 = vsub.s32 3, %v537
        %v539 = vrot.slane %v522, %v538
        %544 = vmatprep.subr.bf16.mxu0 %v459
        %545 = vmatpush1.bf16.msra.mxu0 %v458
        %546 = vmatprep.subr.bf16.mxu0 %v463
        %547 = vmatpush1.bf16.msra.mxu0 %v462
        %548 = vmatprep.subr.bf16.mxu0 %v467
        %549 = vmatpush1.bf16.msra.mxu0 %v466
        %550 = vmatprep.subr.bf16.mxu0 %v471
        %551 = vmatpush1.bf16.msra.mxu0 %v470
        %552 = vmatprep.subr.bf16.mxu0 %v475
        %553 = vmatpush1.bf16.msra.mxu0 %v474
        %554 = vmatprep.subr.bf16.mxu0 %v479
        %555 = vmatpush1.bf16.msra.mxu0 %v478
        %556 = vmatprep.subr.bf16.mxu0 %v483
        %557 = vmatpush1.bf16.msra.mxu0 %v482
        %558 = vmatprep.subr.bf16.mxu0 %v487
        %559 = vmatpush1.bf16.msra.mxu0 %v486
        %560 = vmatprep.subr.bf16.mxu0 %v491
        %561 = vmatpush1.bf16.msra.mxu0 %v490
        %562 = vmatprep.subr.bf16.mxu0 %v495
        %563 = vmatpush1.bf16.msra.mxu0 %v494
        %564 = vmatprep.subr.bf16.mxu0 %v499
        %565 = vmatpush1.bf16.msra.mxu0 %v498
        %566 = vmatprep.subr.bf16.mxu0 %v503
        %567 = vmatpush1.bf16.msra.mxu0 %v502
        %568 = vmatprep.subr.bf16.mxu0 %v507
        %569 = vmatpush1.bf16.msra.mxu0 %v506
        %570 = vmatprep.subr.bf16.mxu0 %v511
        %571 = vmatpush1.bf16.msra.mxu0 %v510
        %572 = vmatprep.subr.bf16.mxu0 %v515
        %573 = vmatpush1.bf16.msra.mxu0 %v514
        %574 = vmatprep.subr.bf16.mxu0 %v519
        %575 = vmatpush1.bf16.msra.mxu0 %v518
        %576 = vmatprep.mubr.bf16.mxu0 %v329
        %577 = vmatmul.mubr.bf16.gmra.mrb[0].mxu0 %v328
        %v578 = vpop.f32.mrb[0].mxu0
        %v579 = vadd.f32 %v527, %v578
        %v580 = vpop.f32.mrb[0].mxu0
        %v581 = vadd.f32 %v531, %v580
        %v582 = vpop.f32.mrb[0].mxu0
        %v583 = vpop.f32.mrb[0].mxu0
        %584 = vdwg.mxu0
        %585 = vmatprep.subr.bf16.mxu0 %v461
        %586 = vmatpush1.bf16.msra.mxu0 %v460
        %587 = vmatprep.subr.bf16.mxu0 %v465
        %588 = vmatpush1.bf16.msra.mxu0 %v464
        %589 = vmatprep.subr.bf16.mxu0 %v469
        %590 = vmatpush1.bf16.msra.mxu0 %v468
        %591 = vmatprep.subr.bf16.mxu0 %v473
        %592 = vmatpush1.bf16.msra.mxu0 %v472
        %593 = vmatprep.subr.bf16.mxu0 %v477
        %594 = vmatpush1.bf16.msra.mxu0 %v476
        %595 = vmatprep.subr.bf16.mxu0 %v481
        %596 = vmatpush1.bf16.msra.mxu0 %v480
        %597 = vmatprep.subr.bf16.mxu0 %v485
        %598 = vmatpush1.bf16.msra.mxu0 %v484
        %599 = vmatprep.subr.bf16.mxu0 %v489
        %600 = vmatpush1.bf16.msra.mxu0 %v488
        %601 = vmatprep.subr.bf16.mxu0 %v493
        %602 = vmatpush1.bf16.msra.mxu0 %v492
        %603 = vmatprep.subr.bf16.mxu0 %v497
        %604 = vmatpush1.bf16.msra.mxu0 %v496
        %605 = vmatprep.subr.bf16.mxu0 %v501
        %606 = vmatpush1.bf16.msra.mxu0 %v500
        %607 = vmatprep.subr.bf16.mxu0 %v505
        %608 = vmatpush1.bf16.msra.mxu0 %v504
        %609 = vmatprep.subr.bf16.mxu0 %v509
        %610 = vmatpush1.bf16.msra.mxu0 %v508
        %611 = vmatprep.subr.bf16.mxu0 %v513
        %612 = vmatpush1.bf16.msra.mxu0 %v512
        %613 = vmatprep.subr.bf16.mxu0 %v517
        %614 = vmatpush1.bf16.msra.mxu0 %v516
        %615 = vmatprep.subr.bf16.mxu0 %v521
        %616 = vmatpush1.bf16.msra.mxu0 %v520
        %617 = vmatprep.mubr.bf16.mxu0 %v329
        %618 = vmatmul.mubr.bf16.gmra.mrb[0].mxu0 %v328
        %v619 = vpop.f32.mrb[0].mxu0
        %v620 = vadd.f32 %v535, %v619
        %v621 = vpop.f32.mrb[0].mxu0
        %v622 = vadd.f32 %v539, %v621
        %v623 = vpop.f32.mrb[0].mxu0
        %v624 = vpop.f32.mrb[0].mxu0
        %625 = vdwg.mxu0
        %v626 = vmul.f32 %v579, 0.5
        %v627 = vmul.f32 %v581, 0.5
        %v628 = vmul.f32 %v620, 0.5
        %v629 = vmul.f32 %v622, 0.5
        %v630 = vmul.f32 %v579, 0.70710677
        %v631 = vmul.f32 %v581, 0.70710677
        %v632 = vmul.f32 %v620, 0.70710677
        %v633 = vmul.f32 %v622, 0.70710677
        %v634 = verf.f32.pop %v630
        %v635 = verf.f32.pop %v631
        %v636 = verf.f32.pop %v632
        %v637 = verf.f32.pop %v633
        %v638 = vadd.f32 %v634, 1.0
        %v639 = vadd.f32 %v635, 1.0
        %v640 = vadd.f32 %v636, 1.0
        %v641 = vadd.f32 %v637, 1.0
        %v642 = vmul.f32 %v626, %v638
        %v643 = vmul.f32 %v627, %v639
        %v644 = vmul.f32 %v628, %v640
        %v645 = vmul.f32 %v629, %v641
        %v646 = vld [vmem:[#allocation2] sm:$0xff]
        %v647 = vld [vmem:[#allocation2 + $0x8] sm:$0xff]
        %v648 = vpack.c.bf16 %v642, %v642
        %v649 = vpack.c.bf16 %v643, %v643
        %v650 = vpack.c.bf16 %v644, %v644
        %v651 = vpack.c.bf16 %v645, %v645
        %v652 = vld [vmem:[#allocation8] sm:$0xff]
        %v653 = vld [vmem:[#allocation8 + $0x8] sm:$0xff]
        %v654 = vld [vmem:[#allocation8 + $0x10] sm:$0xff]
        %v655 = vld [vmem:[#allocation8 + $0x18] sm:$0xff]
        %v656 = vld [vmem:[#allocation8 + $0x20] sm:$0xff]
        %v657 = vld [vmem:[#allocation8 + $0x28] sm:$0xff]
        %v658 = vld [vmem:[#allocation8 + $0x30] sm:$0xff]
        %v659 = vld [vmem:[#allocation8 + $0x38] sm:$0xff]
        %v660 = vld [vmem:[#allocation8 + $0x40] sm:$0xff]
        %v661 = vld [vmem:[#allocation8 + $0x48] sm:$0xff]
        %v662 = vld [vmem:[#allocation8 + $0x50] sm:$0xff]
        %v663 = vld [vmem:[#allocation8 + $0x58] sm:$0xff]
        %v664 = vld [vmem:[#allocation8 + $0x60] sm:$0xff]
        %v665 = vld [vmem:[#allocation8 + $0x68] sm:$0xff]
        %v666 = vld [vmem:[#allocation8 + $0x70] sm:$0xff]
        %v667 = vld [vmem:[#allocation8 + $0x78] sm:$0xff]
        %v668 = vld [vmem:[#allocation8 + $0x80] sm:$0xff]
        %v669 = vld [vmem:[#allocation8 + $0x88] sm:$0xff]
        %v670 = vld [vmem:[#allocation8 + $0x90] sm:$0xff]
        %v671 = vld [vmem:[#allocation8 + $0x98] sm:$0xff]
        %v672 = vld [vmem:[#allocation8 + $0xa0] sm:$0xff]
        %v673 = vld [vmem:[#allocation8 + $0xa8] sm:$0xff]
        %v674 = vld [vmem:[#allocation8 + $0xb0] sm:$0xff]
        %v675 = vld [vmem:[#allocation8 + $0xb8] sm:$0xff]
        %v676 = vld [vmem:[#allocation8 + $0xc0] sm:$0xff]
        %v677 = vld [vmem:[#allocation8 + $0xc8] sm:$0xff]
        %v678 = vld [vmem:[#allocation8 + $0xd0] sm:$0xff]
        %v679 = vld [vmem:[#allocation8 + $0xd8] sm:$0xff]
        %v680 = vld [vmem:[#allocation8 + $0xe0] sm:$0xff]
        %v681 = vld [vmem:[#allocation8 + $0xe8] sm:$0xff]
        %v682 = vld [vmem:[#allocation8 + $0xf0] sm:$0xff]
        %v683 = vld [vmem:[#allocation8 + $0xf8] sm:$0xff]
        %v684 = vld [vmem:[#allocation8 + $0x100] sm:$0xff]
        %v685 = vld [vmem:[#allocation8 + $0x108] sm:$0xff]
        %v686 = vld [vmem:[#allocation8 + $0x110] sm:$0xff]
        %v687 = vld [vmem:[#allocation8 + $0x118] sm:$0xff]
        %v688 = vld [vmem:[#allocation8 + $0x120] sm:$0xff]
        %v689 = vld [vmem:[#allocation8 + $0x128] sm:$0xff]
        %v690 = vld [vmem:[#allocation8 + $0x130] sm:$0xff]
        %v691 = vld [vmem:[#allocation8 + $0x138] sm:$0xff]
        %v692 = vld [vmem:[#allocation8 + $0x140] sm:$0xff]
        %v693 = vld [vmem:[#allocation8 + $0x148] sm:$0xff]
        %v694 = vld [vmem:[#allocation8 + $0x150] sm:$0xff]
        %v695 = vld [vmem:[#allocation8 + $0x158] sm:$0xff]
        %v696 = vld [vmem:[#allocation8 + $0x160] sm:$0xff]
        %v697 = vld [vmem:[#allocation8 + $0x168] sm:$0xff]
        %v698 = vld [vmem:[#allocation8 + $0x170] sm:$0xff]
        %v699 = vld [vmem:[#allocation8 + $0x178] sm:$0xff]
        %v700 = vld [vmem:[#allocation8 + $0x180] sm:$0xff]
        %v701 = vld [vmem:[#allocation8 + $0x188] sm:$0xff]
        %v702 = vld [vmem:[#allocation8 + $0x190] sm:$0xff]
        %v703 = vld [vmem:[#allocation8 + $0x198] sm:$0xff]
        %v704 = vld [vmem:[#allocation8 + $0x1a0] sm:$0xff]
        %v705 = vld [vmem:[#allocation8 + $0x1a8] sm:$0xff]
        %v706 = vld [vmem:[#allocation8 + $0x1b0] sm:$0xff]
        %v707 = vld [vmem:[#allocation8 + $0x1b8] sm:$0xff]
        %v708 = vld [vmem:[#allocation8 + $0x1c0] sm:$0xff]
        %v709 = vld [vmem:[#allocation8 + $0x1c8] sm:$0xff]
        %v710 = vld [vmem:[#allocation8 + $0x1d0] sm:$0xff]
        %v711 = vld [vmem:[#allocation8 + $0x1d8] sm:$0xff]
        %v712 = vld [vmem:[#allocation8 + $0x1e0] sm:$0xff]
        %v713 = vld [vmem:[#allocation8 + $0x1e8] sm:$0xff]
        %v714 = vld [vmem:[#allocation8 + $0x1f0] sm:$0xff]
        %v715 = vld [vmem:[#allocation8 + $0x1f8] sm:$0xff]
        %v716 = vld [vmem:[#allocation8 + $0x200] sm:$0xff]
        %v717 = vld [vmem:[#allocation8 + $0x208] sm:$0xff]
        %v718 = vld [vmem:[#allocation8 + $0x210] sm:$0xff]
        %v719 = vld [vmem:[#allocation8 + $0x218] sm:$0xff]
        %v720 = vld [vmem:[#allocation8 + $0x220] sm:$0xff]
        %v721 = vld [vmem:[#allocation8 + $0x228] sm:$0xff]
        %v722 = vld [vmem:[#allocation8 + $0x230] sm:$0xff]
        %v723 = vld [vmem:[#allocation8 + $0x238] sm:$0xff]
        %v724 = vld [vmem:[#allocation8 + $0x240] sm:$0xff]
        %v725 = vld [vmem:[#allocation8 + $0x248] sm:$0xff]
        %v726 = vld [vmem:[#allocation8 + $0x250] sm:$0xff]
        %v727 = vld [vmem:[#allocation8 + $0x258] sm:$0xff]
        %v728 = vld [vmem:[#allocation8 + $0x260] sm:$0xff]
        %v729 = vld [vmem:[#allocation8 + $0x268] sm:$0xff]
        %v730 = vld [vmem:[#allocation8 + $0x270] sm:$0xff]
        %v731 = vld [vmem:[#allocation8 + $0x278] sm:$0xff]
        %v732 = vld [vmem:[#allocation8 + $0x280] sm:$0xff]
        %v733 = vld [vmem:[#allocation8 + $0x288] sm:$0xff]
        %v734 = vld [vmem:[#allocation8 + $0x290] sm:$0xff]
        %v735 = vld [vmem:[#allocation8 + $0x298] sm:$0xff]
        %v736 = vld [vmem:[#allocation8 + $0x2a0] sm:$0xff]
        %v737 = vld [vmem:[#allocation8 + $0x2a8] sm:$0xff]
        %v738 = vld [vmem:[#allocation8 + $0x2b0] sm:$0xff]
        %v739 = vld [vmem:[#allocation8 + $0x2b8] sm:$0xff]
        %v740 = vld [vmem:[#allocation8 + $0x2c0] sm:$0xff]
        %v741 = vld [vmem:[#allocation8 + $0x2c8] sm:$0xff]
        %v742 = vld [vmem:[#allocation8 + $0x2d0] sm:$0xff]
        %v743 = vld [vmem:[#allocation8 + $0x2d8] sm:$0xff]
        %v744 = vld [vmem:[#allocation8 + $0x2e0] sm:$0xff]
        %v745 = vld [vmem:[#allocation8 + $0x2e8] sm:$0xff]
        %v746 = vld [vmem:[#allocation8 + $0x2f0] sm:$0xff]
        %v747 = vld [vmem:[#allocation8 + $0x2f8] sm:$0xff]
        %v748 = vld [vmem:[#allocation8 + $0x300] sm:$0xff]
        %v749 = vld [vmem:[#allocation8 + $0x308] sm:$0xff]
        %v750 = vld [vmem:[#allocation8 + $0x310] sm:$0xff]
        %v751 = vld [vmem:[#allocation8 + $0x318] sm:$0xff]
        %v752 = vld [vmem:[#allocation8 + $0x320] sm:$0xff]
        %v753 = vld [vmem:[#allocation8 + $0x328] sm:$0xff]
        %v754 = vld [vmem:[#allocation8 + $0x330] sm:$0xff]
        %v755 = vld [vmem:[#allocation8 + $0x338] sm:$0xff]
        %v756 = vld [vmem:[#allocation8 + $0x340] sm:$0xff]
        %v757 = vld [vmem:[#allocation8 + $0x348] sm:$0xff]
        %v758 = vld [vmem:[#allocation8 + $0x350] sm:$0xff]
        %v759 = vld [vmem:[#allocation8 + $0x358] sm:$0xff]
        %v760 = vld [vmem:[#allocation8 + $0x360] sm:$0xff]
        %v761 = vld [vmem:[#allocation8 + $0x368] sm:$0xff]
        %v762 = vld [vmem:[#allocation8 + $0x370] sm:$0xff]
        %v763 = vld [vmem:[#allocation8 + $0x378] sm:$0xff]
        %v764 = vld [vmem:[#allocation8 + $0x380] sm:$0xff]
        %v765 = vld [vmem:[#allocation8 + $0x388] sm:$0xff]
        %v766 = vld [vmem:[#allocation8 + $0x390] sm:$0xff]
        %v767 = vld [vmem:[#allocation8 + $0x398] sm:$0xff]
        %v768 = vld [vmem:[#allocation8 + $0x3a0] sm:$0xff]
        %v769 = vld [vmem:[#allocation8 + $0x3a8] sm:$0xff]
        %v770 = vld [vmem:[#allocation8 + $0x3b0] sm:$0xff]
        %v771 = vld [vmem:[#allocation8 + $0x3b8] sm:$0xff]
        %v772 = vld [vmem:[#allocation8 + $0x3c0] sm:$0xff]
        %v773 = vld [vmem:[#allocation8 + $0x3c8] sm:$0xff]
        %v774 = vld [vmem:[#allocation8 + $0x3d0] sm:$0xff]
        %v775 = vld [vmem:[#allocation8 + $0x3d8] sm:$0xff]
        %v776 = vld [vmem:[#allocation8 + $0x3e0] sm:$0xff]
        %v777 = vld [vmem:[#allocation8 + $0x3e8] sm:$0xff]
        %v778 = vld [vmem:[#allocation8 + $0x3f0] sm:$0xff]
        %v779 = vld [vmem:[#allocation8 + $0x3f8] sm:$0xff]
        %v780 = vpack.c.bf16 %v654, %v652
        %v781 = vpack.c.bf16 %v655, %v653
        %v782 = vpack.c.bf16 %v658, %v656
        %v783 = vpack.c.bf16 %v659, %v657
        %v784 = vpack.c.bf16 %v662, %v660
        %v785 = vpack.c.bf16 %v663, %v661
        %v786 = vpack.c.bf16 %v666, %v664
        %v787 = vpack.c.bf16 %v667, %v665
        %v788 = vpack.c.bf16 %v670, %v668
        %v789 = vpack.c.bf16 %v671, %v669
        %v790 = vpack.c.bf16 %v674, %v672
        %v791 = vpack.c.bf16 %v675, %v673
        %v792 = vpack.c.bf16 %v678, %v676
        %v793 = vpack.c.bf16 %v679, %v677
        %v794 = vpack.c.bf16 %v682, %v680
        %v795 = vpack.c.bf16 %v683, %v681
        %v796 = vpack.c.bf16 %v686, %v684
        %v797 = vpack.c.bf16 %v687, %v685
        %v798 = vpack.c.bf16 %v690, %v688
        %v799 = vpack.c.bf16 %v691, %v689
        %v800 = vpack.c.bf16 %v694, %v692
        %v801 = vpack.c.bf16 %v695, %v693
        %v802 = vpack.c.bf16 %v698, %v696
        %v803 = vpack.c.bf16 %v699, %v697
        %v804 = vpack.c.bf16 %v702, %v700
        %v805 = vpack.c.bf16 %v703, %v701
        %v806 = vpack.c.bf16 %v706, %v704
        %v807 = vpack.c.bf16 %v707, %v705
        %v808 = vpack.c.bf16 %v710, %v708
        %v809 = vpack.c.bf16 %v711, %v709
        %v810 = vpack.c.bf16 %v714, %v712
        %v811 = vpack.c.bf16 %v715, %v713
        %v812 = vpack.c.bf16 %v718, %v716
        %v813 = vpack.c.bf16 %v719, %v717
        %v814 = vpack.c.bf16 %v722, %v720
        %v815 = vpack.c.bf16 %v723, %v721
        %v816 = vpack.c.bf16 %v726, %v724
        %v817 = vpack.c.bf16 %v727, %v725
        %v818 = vpack.c.bf16 %v730, %v728
        %v819 = vpack.c.bf16 %v731, %v729
        %v820 = vpack.c.bf16 %v734, %v732
        %v821 = vpack.c.bf16 %v735, %v733
        %v822 = vpack.c.bf16 %v738, %v736
        %v823 = vpack.c.bf16 %v739, %v737
        %v824 = vpack.c.bf16 %v742, %v740
        %v825 = vpack.c.bf16 %v743, %v741
        %v826 = vpack.c.bf16 %v746, %v744
        %v827 = vpack.c.bf16 %v747, %v745
        %v828 = vpack.c.bf16 %v750, %v748
        %v829 = vpack.c.bf16 %v751, %v749
        %v830 = vpack.c.bf16 %v754, %v752
        %v831 = vpack.c.bf16 %v755, %v753
        %v832 = vpack.c.bf16 %v758, %v756
        %v833 = vpack.c.bf16 %v759, %v757
        %v834 = vpack.c.bf16 %v762, %v760
        %v835 = vpack.c.bf16 %v763, %v761
        %v836 = vpack.c.bf16 %v766, %v764
        %v837 = vpack.c.bf16 %v767, %v765
        %v838 = vpack.c.bf16 %v770, %v768
        %v839 = vpack.c.bf16 %v771, %v769
        %v840 = vpack.c.bf16 %v774, %v772
        %v841 = vpack.c.bf16 %v775, %v773
        %v842 = vpack.c.bf16 %v778, %v776
        %v843 = vpack.c.bf16 %v779, %v777
        %844 = vmatprep.subr.bf16.mxu0 %v781
        %845 = vmatpush1.bf16.msra.mxu0 %v780
        %846 = vmatprep.subr.bf16.mxu0 %v783
        %847 = vmatpush1.bf16.msra.mxu0 %v782
        %848 = vmatprep.subr.bf16.mxu0 %v785
        %849 = vmatpush1.bf16.msra.mxu0 %v784
        %850 = vmatprep.subr.bf16.mxu0 %v787
        %851 = vmatpush1.bf16.msra.mxu0 %v786
        %852 = vmatprep.subr.bf16.mxu0 %v789
        %853 = vmatpush1.bf16.msra.mxu0 %v788
        %854 = vmatprep.subr.bf16.mxu0 %v791
        %855 = vmatpush1.bf16.msra.mxu0 %v790
        %856 = vmatprep.subr.bf16.mxu0 %v793
        %857 = vmatpush1.bf16.msra.mxu0 %v792
        %858 = vmatprep.subr.bf16.mxu0 %v795
        %859 = vmatpush1.bf16.msra.mxu0 %v794
        %860 = vmatprep.subr.bf16.mxu0 %v797
        %861 = vmatpush1.bf16.msra.mxu0 %v796
        %862 = vmatprep.subr.bf16.mxu0 %v799
        %863 = vmatpush1.bf16.msra.mxu0 %v798
        %864 = vmatprep.subr.bf16.mxu0 %v801
        %865 = vmatpush1.bf16.msra.mxu0 %v800
        %866 = vmatprep.subr.bf16.mxu0 %v803
        %867 = vmatpush1.bf16.msra.mxu0 %v802
        %868 = vmatprep.subr.bf16.mxu0 %v805
        %869 = vmatpush1.bf16.msra.mxu0 %v804
        %870 = vmatprep.subr.bf16.mxu0 %v807
        %871 = vmatpush1.bf16.msra.mxu0 %v806
        %872 = vmatprep.subr.bf16.mxu0 %v809
        %873 = vmatpush1.bf16.msra.mxu0 %v808
        %874 = vmatprep.subr.bf16.mxu0 %v811
        %875 = vmatpush1.bf16.msra.mxu0 %v810
        %876 = vmatprep.mubr.bf16.mxu0 %v649
        %877 = vmatmul.mubr.bf16.gmra.mrb[0].mxu0 %v648
        %v878 = vpop.f32.mrb[0].mxu0
        %v879 = vadd.f32 0.0, %v878
        %v880 = vpop.f32.mrb[0].mxu0
        %v881 = vadd.f32 0.0, %v880
        %v882 = vpop.f32.mrb[0].mxu0
        %v883 = vpop.f32.mrb[0].mxu0
        %884 = vdwg.mxu0
        %885 = vmatprep.subr.bf16.mxu0 %v813
        %886 = vmatpush1.bf16.msra.mxu0 %v812
        %887 = vmatprep.subr.bf16.mxu0 %v815
        %888 = vmatpush1.bf16.msra.mxu0 %v814
        %889 = vmatprep.subr.bf16.mxu0 %v817
        %890 = vmatpush1.bf16.msra.mxu0 %v816
        %891 = vmatprep.subr.bf16.mxu0 %v819
        %892 = vmatpush1.bf16.msra.mxu0 %v818
        %893 = vmatprep.subr.bf16.mxu0 %v821
        %894 = vmatpush1.bf16.msra.mxu0 %v820
        %895 = vmatprep.subr.bf16.mxu0 %v823
        %896 = vmatpush1.bf16.msra.mxu0 %v822
        %897 = vmatprep.subr.bf16.mxu0 %v825
        %898 = vmatpush1.bf16.msra.mxu0 %v824
        %899 = vmatprep.subr.bf16.mxu0 %v827
        %900 = vmatpush1.bf16.msra.mxu0 %v826
        %901 = vmatprep.subr.bf16.mxu0 %v829
        %902 = vmatpush1.bf16.msra.mxu0 %v828
        %903 = vmatprep.subr.bf16.mxu0 %v831
        %904 = vmatpush1.bf16.msra.mxu0 %v830
        %905 = vmatprep.subr.bf16.mxu0 %v833
        %906 = vmatpush1.bf16.msra.mxu0 %v832
        %907 = vmatprep.subr.bf16.mxu0 %v835
        %908 = vmatpush1.bf16.msra.mxu0 %v834
        %909 = vmatprep.subr.bf16.mxu0 %v837
        %910 = vmatpush1.bf16.msra.mxu0 %v836
        %911 = vmatprep.subr.bf16.mxu0 %v839
        %912 = vmatpush1.bf16.msra.mxu0 %v838
        %913 = vmatprep.subr.bf16.mxu0 %v841
        %914 = vmatpush1.bf16.msra.mxu0 %v840
        %915 = vmatprep.subr.bf16.mxu0 %v843
        %916 = vmatpush1.bf16.msra.mxu0 %v842
        %917 = vmatprep.mubr.bf16.mxu0 %v651
        %918 = vmatmul.mubr.bf16.gmra.mrb[0].mxu0 %v650
        %v919 = vpop.f32.mrb[0].mxu0
        %v920 = vadd.f32 %v879, %v919
        %v921 = vpop.f32.mrb[0].mxu0
        %v922 = vadd.f32 %v881, %v921
        %v923 = vpop.f32.mrb[0].mxu0
        %v924 = vpop.f32.mrb[0].mxu0
        %925 = vdwg.mxu0
        %v926 = vadd.f32 %v646, %v920
        %v927 = vadd.f32 %v647, %v922
        %928 = vst [vmem:[#allocation2] sm:$0xff] %v926
        %929 = vst [vmem:[#allocation2 + $0x8] sm:$0xff] %v927
        // Predicated region
        $region57: #{tpu_custom_call.1} parent=39 // pred_check
          %p930 = pneg %p320
        $region58: #{tpu_custom_call.1} parent=39 // pred_check_branch
          %932 = sbr.rel (%p930) target = $region60
        $region59: #{tpu_custom_call.1} parent=39 // pred_region
          %v933 = vld [vmem:[#allocation2] sm:$0xff]
          %v934 = vld [vmem:[#allocation2 + $0x8] sm:$0xff]
          %v935 = vld [vmem:[%s4] sm:$0x3]
          %v937 = vlaneseq
          %v938 = vshrl.u32 %v937, 7
          %v939 = vsub.s32 0, %v938
          %v940 = vrot.slane %v935, %v939
          %v941 = vlaneseq
          %v942 = vshrl.u32 %v941, 7
          %v943 = vsub.s32 1, %v942
          %v944 = vrot.slane %v935, %v943
          %v947 = vadd.f32 %v933, %v940
          %v948 = vadd.f32 %v934, %v944
          %949 = vst [vmem:[%s312] sm:$0xff] %v947
          %950 = vst [vmem:[%s312 + $0x8] sm:$0xff] %v948
        $region60: #{tpu_custom_call.1} parent=39 // pred_fallthru
          _
        %s951 = sand.u32 %s168, 1
        %s952 = scalar_lea.sflag [#allocation5], %s951
        %s953 = sand.u32 %s168, 1
        %s954 = smul.addr %s953, 16
        %s955 = scalar_lea.vmem [#allocation9], %s954
        // Predicated region
        $region61: #{tpu_custom_call.1} parent=39 // pred_check
          %p956 = pneg %p178
        $region62: #{tpu_custom_call.1} parent=39 // pred_check_branch
          %958 = sbr.rel (%p956) target = $region64
        $region63: #{tpu_custom_call.1} parent=39 // pred_region
          %s960 = ssub.s32 256, 256
          %961 = vsyncadd %s952, %s960
          %s962 = smul.addr %s27, 2
          %s963 = smul.addr %s962, 128
          %s964 = scalar_lea.hbm %s5, %s963
          %s966 = sshll.u32 %s955, 4
          %s967 = int_to_ptr.vmem [resolvable:$true] %s966
          %969 = dma.vmem_to_hbm [thread:$0]  %s967, 256, %s964, %s952
        $region64: #{tpu_custom_call.1} parent=39 // pred_fallthru
          _
      $region40: #{tpu_custom_call.1} parent=5 // pred_fallthru
        _
      %p970 = scmp.le.s32.totalorder 2, %s18
      // Predicated region
      $region65: #{tpu_custom_call.1} parent=5 // pred_check
        %p971 = pneg %p970
      $region66: #{tpu_custom_call.1} parent=5 // pred_check_branch
        %973 = sbr.rel (%p971) target = $region68
      $region67: #{tpu_custom_call.1} parent=5 // pred_region
        %s974 = ssub.s32 %s18, 2
        // Predicated region
        $region69: #{tpu_custom_call.1} parent=67 // pred_check
          %p975 = pneg %p184
        $region70: #{tpu_custom_call.1} parent=67 // pred_check_branch
          %977 = sbr.rel (%p975) target = $region72
        $region71: #{tpu_custom_call.1} parent=67 // pred_region
          %s978 = sand.u32 %s169, 1
          %s979 = scalar_lea.sflag [#allocation5], %s978
          %s980 = sand.u32 %s169, 1
          %s981 = smul.addr %s980, 16
          %s982 = scalar_lea.vmem [#allocation9], %s981
          %983 = dma.done %s979, 256
        $region72: #{tpu_custom_call.1} parent=67 // pred_fallthru
          _
      $region68: #{tpu_custom_call.1} parent=5 // pred_fallthru
        _
    $region6: #{tpu_custom_call.1} parent=1 // loop_footer
      %s22 = sadd.s32 1, %s18
    $region7: #{tpu_custom_call.1} parent=1 // loop_footer_branch
      %17 = sbr.rel target = $region3
    $region8: #{tpu_custom_call.1} parent=1 // loop_exit
      _
    %984 = vsyncpa [#allocation4], 1
    %s985 = scalar_lea.sflag [#allocation4], 1
    %986 = vsyncpa %s985, 1
    %987 = vsyncpa [#allocation7], 1
    %988 = vsyncpa [#allocation5], 1
    %s989 = scalar_lea.sflag [#allocation5], 1
    %990 = vsyncpa %s989, 1

</llo_original>
